<compile_context>
chip_gen: v7x
topology: tpu7x:2x2x1
jax: 0.10.0
libtpu: 0.0.40
codegen_flags: <defaults>
</compile_context>

<pallas_src>
import functools

import jax
import jax.numpy as jnp
import numpy as np
from jax.experimental import pallas as pl
from jax.experimental.pallas import tpu as pltpu


# ---------------------------------------------------------------------------
# Kernel
# ---------------------------------------------------------------------------
def _qmixer_kernel(qs_ref, s_ref,
                   wa_ref, ba_ref,      # fused first layers   : (4H, S), (4H, 1)
                   wb_ref, bb_ref,      # block-diag 2nd layers : (2H, 2H), (2H, 1)
                   wc_ref, bc_ref,      # block-diag out layers : (P3, 4H), (P3, 1)
                   out_ref,
                   *, n_agents, embed_dim, hypernet_embed):
    A, E, H = n_agents, embed_dim, hypernet_embed

    sT = s_ref[...].astype(jnp.float32)     # (S, TB)   batch on lanes
    qsT = qs_ref[...].astype(jnp.float32)   # (A, TB)

    def linT(w_ref, b_ref, x):
        # y^T = W @ x^T + b  (weights stored (out, in), bias (out, 1))
        return jnp.dot(w_ref[...], x, preferred_element_type=jnp.float32) + b_ref[...]

    # Stage 1: first Linear of all four hypernets in one matmul.
    h_all = jnp.maximum(linT(wa_ref, ba_ref, sT), 0.0)                  # (4H, TB)

    # Stage 2: second Linear of hyper_w1 / hyper_w2 (block-diagonal).
    h12 = jnp.maximum(linT(wb_ref, bb_ref, h_all[0:2 * H, :]), 0.0)     # (2H, TB)

    # Stage 3: output Linear of all four hypernets (block-diagonal, no ReLU).
    h3_in = jnp.concatenate([h12, h_all[2 * H:4 * H, :]], axis=0)        # (4H, TB)
    h3 = linT(wc_ref, bc_ref, h3_in)                                     # (P3, TB)

    # Per-sample mixing parameters (rows = features, lanes = batch).
    w1T = h3[0:A * E, :]                               # (A*E, TB)
    w2T = h3[A * E:A * E + E, :]                       # (E,   TB)
    b1T = h3[A * E + E:A * E + 2 * E, :]               # (E,   TB)
    b2T = h3[A * E + 2 * E:A * E + 2 * E + 1, :]       # (1,   TB)

    # Mixing layer 1: hidden[e,b] = relu( sum_a qs[a,b] * w1[a*E+e, b] + b1[e,b] )
    acc = b1T
    for a in range(A):  # A sublane-aligned (E, TB) slabs; qs row is a sublane broadcast
        acc = acc + qsT[a:a + 1, :] * w1T[a * E:(a + 1) * E, :]
    hiddenT = jnp.maximum(acc, 0.0)                    # (E, TB)

    # Mixing layer 2: y[b] = sum_e hidden[e,b] * w2[e,b] + b2[b]   (lane-dense row)
    yT = jnp.sum(hiddenT * w2T, axis=0, keepdims=True) + b2T       # (1, TB)
    out_ref[...] = yT.astype(out_ref.dtype)


# ---------------------------------------------------------------------------
# Parameter creation / packing (PyTorch nn.Linear layout: W (out, in), b (out,))
# ---------------------------------------------------------------------------
def init_qmixer_torch_params(key, state_dim, n_agents, output_dim=1, embed_dim=32,
                             hypernet_embed=64, dtype=jnp.float32):
    H, E, A, S = hypernet_embed, embed_dim, n_agents, state_dim
    shapes = [
        (H, S), (H,), (H, H), (H,), (A * E, H), (A * E,),       # hyper_w1
        (H, S), (H,), (H, H), (H,), (E, H), (E,),               # hyper_w2
        (H, S), (H,), (E, H), (E,),                             # hyper_b1
        (H, S), (H,), (output_dim, H), (output_dim,),           # hyper_b2
    ]
    keys = jax.random.split(key, len(shapes))
    params = []
    for k, shp in zip(keys, shapes):
        fan_in = shp[-1] if len(shp) == 2 else max(shp[0], 1)
        scale = 1.0 / np.sqrt(fan_in)
        params.append(jax.random.uniform(k, shp, dtype, -scale, scale))
    return params


def pack_qmixer_params(tp, *, n_agents, output_dim, embed_dim, hypernet_embed,
                       dtype=jnp.float32):
    assert output_dim == 1, "QMixer forward implies output_dim == 1"
    (w1_0, b1_0, w1_2, b1_2, w1_4, b1_4,
     w2_0, b2_0, w2_2, b2_2, w2_4, b2_4,
     hb1_0, hb1_0b, hb1_2, hb1_2b,
     hb2_0, hb2_0b, hb2_2, hb2_2b) = tp
    H, E, A = hypernet_embed, embed_dim, n_agents

    # Stage 1: four first layers stacked along the output dim.
    Wa = jnp.concatenate([w1_0, w2_0, hb1_0, hb2_0], axis=0).astype(dtype)     # (4H, S)
    ba = jnp.concatenate([b1_0, b2_0, hb1_0b, hb2_0b])[:, None].astype(dtype)  # (4H, 1)

    # Stage 2: block-diagonal second layers (hyper_w1, hyper_w2).
    Wb = jnp.zeros((2 * H, 2 * H), dtype)
    Wb = Wb.at[:H, :H].set(w1_2).at[H:, H:].set(w2_2)                          # (2H, 2H)
    bb = jnp.concatenate([b1_2, b2_2])[:, None].astype(dtype)                  # (2H, 1)

    # Stage 3: block-diagonal output layers; rows padded to a multiple of 8.
    p3_raw = A * E + 2 * E + output_dim
    P3 = ((p3_raw + 7) // 8) * 8
    Wc = jnp.zeros((P3, 4 * H), dtype)
    Wc = Wc.at[0:A * E, 0:H].set(w1_4)
    Wc = Wc.at[A * E:A * E + E, H:2 * H].set(w2_4)
    Wc = Wc.at[A * E + E:A * E + 2 * E, 2 * H:3 * H].set(hb1_2)
    Wc = Wc.at[A * E + 2 * E:p3_raw, 3 * H:4 * H].set(hb2_2)
    bc = jnp.zeros((P3, 1), dtype)
    bc = bc.at[0:A * E, 0].set(b1_4)
    bc = bc.at[A * E:A * E + E, 0].set(b2_4)
    bc = bc.at[A * E + E:A * E + 2 * E, 0].set(hb1_2b)
    bc = bc.at[A * E + 2 * E:p3_raw, 0].set(hb2_2b)
    return [Wa, ba, Wb, bb, Wc, bc]


# ---------------------------------------------------------------------------
# Wrapper
# ---------------------------------------------------------------------------
def qmixer_forward(agent_qs, states, packed_params, *, n_agents, embed_dim,
                   hypernet_embed, tb=None):
    B, A = agent_qs.shape
    _, S = states.shape
    assert A == n_agents and states.shape[0] == B

    if tb is None:
        tb = min(B, 512)                       # batch tile (lane dim of all activations)
    assert B % tb == 0, "tb must divide B"
    assert tb % 128 == 0 or tb == B, "tb must be a multiple of 128 (or the full batch)"

    # Transposed (feature-major) inputs so the batch rides the lane axis in-kernel.
    qsT = jnp.transpose(agent_qs).astype(jnp.float32)   # (A, B)
    sT = jnp.transpose(states).astype(jnp.float32)      # (S, B)

    kernel = functools.partial(_qmixer_kernel, n_agents=n_agents,
                               embed_dim=embed_dim, hypernet_embed=hypernet_embed)

    in_specs = [
        pl.BlockSpec((A, tb), lambda i: (0, i)),
        pl.BlockSpec((S, tb), lambda i: (0, i)),
    ] + [pl.BlockSpec(p.shape, lambda i: (0, 0)) for p in packed_params]

    out = pl.pallas_call(
        kernel,
        out_shape=jax.ShapeDtypeStruct((1, B), jnp.float32),
        grid_spec=pltpu.PrefetchScalarGridSpec(
            num_scalar_prefetch=0,
            grid=(B // tb,),
            in_specs=in_specs,
            out_specs=pl.BlockSpec((1, tb), lambda i: (0, i)),
        ),
        compiler_params=pltpu.CompilerParams(
            dimension_semantics=("parallel",)),
    )(qsT, sT, *packed_params)

    return out.reshape(B, 1)   # q_tot: (B, 1)


# ---------------------------------------------------------------------------
# Pure-JAX reference (mirrors the PyTorch forward exactly)
# ---------------------------------------------------------------------------
def _reference_forward(agent_qs, states, tp, *, n_agents, embed_dim):
    (w1_0, b1_0, w1_2, b1_2, w1_4, b1_4,
     w2_0, b2_0, w2_2, b2_2, w2_4, b2_4,
     hb1_0, hb1_0b, hb1_2, hb1_2b,
     hb2_0, hb2_0b, hb2_2, hb2_2b) = tp
    relu = jax.nn.relu
    lin = lambda x, W, b: x @ W.T + b
    B = states.shape[0]

    w1 = lin(relu(lin(relu(lin(states, w1_0, b1_0)), w1_2, b1_2)), w1_4, b1_4)
    w2 = lin(relu(lin(relu(lin(states, w2_0, b2_0)), w2_2, b2_2)), w2_4, b2_4)
    b1 = lin(relu(lin(states, hb1_0, hb1_0b)), hb1_2, hb1_2b)
    b2 = lin(relu(lin(states, hb2_0, hb2_0b)), hb2_2, hb2_2b)

    qs = agent_qs.reshape(B, 1, n_agents)
    w1 = w1.reshape(B, n_agents, embed_dim)
    hidden = relu(jnp.einsum('bia,bae->bie', qs, w1) + b1.reshape(B, 1, embed_dim))
    y = jnp.einsum('bie,beo->bio', hidden, w2.reshape(B, embed_dim, 1)) + b2.reshape(B, 1, 1)
    return y.reshape(B, 1)


if __name__ == "__main__":
    state_dim = 16
    n_agents = 4
    embed_dim = 32
    hypernet_embed = 64
    output_dim = 1
    B = 1024            # grid of 2 steps at tb=512 -> both TensorCores busy on v7x
    tb = 512

    key = jax.random.PRNGKey(0)
    k_p, k_q, k_s = jax.random.split(key, 3)

    torch_params = init_qmixer_torch_params(k_p, state_dim, n_agents, output_dim,
                                            embed_dim, hypernet_embed)
    packed = pack_qmixer_params(torch_params, n_agents=n_agents, output_dim=output_dim,
                                embed_dim=embed_dim, hypernet_embed=hypernet_embed)

    agent_qs = jax.random.normal(k_q, (B, n_agents), jnp.float32)
    states = jax.random.normal(k_s, (B, state_dim), jnp.float32)

    q_tot = qmixer_forward(agent_qs, states, packed,
                           n_agents=n_agents, embed_dim=embed_dim,
                           hypernet_embed=hypernet_embed, tb=tb)
    q_tot = jax.block_until_ready(q_tot)

    ref = _reference_forward(agent_qs, states, torch_params,
                             n_agents=n_agents, embed_dim=embed_dim)
    np.testing.assert_allclose(np.asarray(q_tot), np.asarray(ref), rtol=5e-5, atol=5e-5)
    assert q_tot.shape == (B, 1)
    print("KERNEL_OK")
</pallas_src>

<mosaic_0001>
module attributes {stable_mosaic.version = 11 : i64} {
  func.func @_qmixer_kernel(%arg0: i32, %arg1: memref<4x512xf32, #tpu.memory_space<vmem>>, %arg2: memref<16x512xf32, #tpu.memory_space<vmem>>, %arg3: memref<256x16xf32, #tpu.memory_space<vmem>>, %arg4: memref<256x1xf32, #tpu.memory_space<vmem>>, %arg5: memref<128x128xf32, #tpu.memory_space<vmem>>, %arg6: memref<128x1xf32, #tpu.memory_space<vmem>>, %arg7: memref<200x256xf32, #tpu.memory_space<vmem>>, %arg8: memref<200x1xf32, #tpu.memory_space<vmem>>, %arg9: memref<1x512xf32, #tpu.memory_space<vmem>>) attributes {dimension_semantics = [#tpu.dimension_semantics<parallel>], iteration_bounds = array<i64: 2>, scalar_prefetch = 0 : i64, scratch_operands = 0 : i64, tpu.core_type = #tpu.core_type<tc>, window_params = [{transform_indices = @transform_0, window_bounds = array<i64: 4, 512>}, {transform_indices = @transform_1, window_bounds = array<i64: 16, 512>}, {pipeline_mode = #tpu.pipeline_mode<synchronous>, transform_indices = @transform_2, window_bounds = array<i64: 256, 16>}, {pipeline_mode = #tpu.pipeline_mode<synchronous>, transform_indices = @transform_3, window_bounds = array<i64: 256, 1>}, {pipeline_mode = #tpu.pipeline_mode<synchronous>, transform_indices = @transform_4, window_bounds = array<i64: 128, 128>}, {pipeline_mode = #tpu.pipeline_mode<synchronous>, transform_indices = @transform_5, window_bounds = array<i64: 128, 1>}, {pipeline_mode = #tpu.pipeline_mode<synchronous>, transform_indices = @transform_6, window_bounds = array<i64: 200, 256>}, {pipeline_mode = #tpu.pipeline_mode<synchronous>, transform_indices = @transform_7, window_bounds = array<i64: 200, 1>}, {transform_indices = @transform_8, window_bounds = array<i64: 1, 512>}]} {
    %c0 = arith.constant 0 : index
    %c0_0 = arith.constant 0 : index
    %0 = vector.load %arg2[%c0, %c0_0] : memref<16x512xf32, #tpu.memory_space<vmem>>, vector<16x512xf32>
    %c0_1 = arith.constant 0 : index
    %c0_2 = arith.constant 0 : index
    %1 = vector.load %arg1[%c0_1, %c0_2] : memref<4x512xf32, #tpu.memory_space<vmem>>, vector<4x512xf32>
    %c0_3 = arith.constant 0 : index
    %c0_4 = arith.constant 0 : index
    %2 = vector.load %arg3[%c0_3, %c0_4] : memref<256x16xf32, #tpu.memory_space<vmem>>, vector<256x16xf32>
    %cst = arith.constant dense<0.000000e+00> : vector<256x512xf32>
    %3 = tpu.matmul %2, %0, %cst {dimension_numbers = #tpu.dot_dimension_numbers<[1], [0], [0], [1], [0, 0, 1, 1], [], []>} : vector<256x16xf32>, vector<16x512xf32>, vector<256x512xf32> -> vector<256x512xf32>
    %c0_5 = arith.constant 0 : index
    %c0_6 = arith.constant 0 : index
    %4 = vector.load %arg4[%c0_5, %c0_6] : memref<256x1xf32, #tpu.memory_space<vmem>>, vector<256x1xf32>
    %5 = vector.broadcast %4 : vector<256x1xf32> to vector<256x512xf32>
    %6 = arith.addf %3, %5 : vector<256x512xf32>
    %cst_7 = arith.constant 0.000000e+00 : f32
    %7 = vector.broadcast %cst_7 : f32 to vector<256x512xf32>
    %8 = arith.maximumf %6, %7 : vector<256x512xf32>
    %9 = vector.extract_strided_slice %8 {offsets = [0, 0], sizes = [128, 512], strides = [1, 1]} : vector<256x512xf32> to vector<128x512xf32>
    %c0_8 = arith.constant 0 : index
    %c0_9 = arith.constant 0 : index
    %10 = vector.load %arg5[%c0_8, %c0_9] : memref<128x128xf32, #tpu.memory_space<vmem>>, vector<128x128xf32>
    %cst_10 = arith.constant dense<0.000000e+00> : vector<128x512xf32>
    %11 = tpu.matmul %10, %9, %cst_10 {dimension_numbers = #tpu.dot_dimension_numbers<[1], [0], [0], [1], [0, 0, 1, 1], [], []>} : vector<128x128xf32>, vector<128x512xf32>, vector<128x512xf32> -> vector<128x512xf32>
    %c0_11 = arith.constant 0 : index
    %c0_12 = arith.constant 0 : index
    %12 = vector.load %arg6[%c0_11, %c0_12] : memref<128x1xf32, #tpu.memory_space<vmem>>, vector<128x1xf32>
    %13 = vector.broadcast %12 : vector<128x1xf32> to vector<128x512xf32>
    %14 = arith.addf %11, %13 : vector<128x512xf32>
    %cst_13 = arith.constant 0.000000e+00 : f32
    %15 = vector.broadcast %cst_13 : f32 to vector<128x512xf32>
    %16 = arith.maximumf %14, %15 : vector<128x512xf32>
    %17 = vector.extract_strided_slice %8 {offsets = [128, 0], sizes = [128, 512], strides = [1, 1]} : vector<256x512xf32> to vector<128x512xf32>
    %18 = tpu.concatenate %16, %17 in 0 : vector<128x512xf32>, vector<128x512xf32> -> vector<256x512xf32>
    %c0_14 = arith.constant 0 : index
    %c0_15 = arith.constant 0 : index
    %19 = vector.load %arg7[%c0_14, %c0_15] : memref<200x256xf32, #tpu.memory_space<vmem>>, vector<200x256xf32>
    %cst_16 = arith.constant dense<0.000000e+00> : vector<200x512xf32>
    %20 = tpu.matmul %19, %18, %cst_16 {dimension_numbers = #tpu.dot_dimension_numbers<[1], [0], [0], [1], [0, 0, 1, 1], [], []>} : vector<200x256xf32>, vector<256x512xf32>, vector<200x512xf32> -> vector<200x512xf32>
    %c0_17 = arith.constant 0 : index
    %c0_18 = arith.constant 0 : index
    %21 = vector.load %arg8[%c0_17, %c0_18] : memref<200x1xf32, #tpu.memory_space<vmem>>, vector<200x1xf32>
    %22 = vector.broadcast %21 : vector<200x1xf32> to vector<200x512xf32>
    %23 = arith.addf %20, %22 : vector<200x512xf32>
    %24 = vector.extract_strided_slice %23 {offsets = [0, 0], sizes = [128, 512], strides = [1, 1]} : vector<200x512xf32> to vector<128x512xf32>
    %25 = vector.extract_strided_slice %23 {offsets = [128, 0], sizes = [32, 512], strides = [1, 1]} : vector<200x512xf32> to vector<32x512xf32>
    %26 = vector.extract_strided_slice %23 {offsets = [160, 0], sizes = [32, 512], strides = [1, 1]} : vector<200x512xf32> to vector<32x512xf32>
    %27 = vector.extract_strided_slice %23 {offsets = [192, 0], sizes = [1, 512], strides = [1, 1]} : vector<200x512xf32> to vector<1x512xf32>
    %28 = vector.extract_strided_slice %1 {offsets = [0, 0], sizes = [1, 512], strides = [1, 1]} : vector<4x512xf32> to vector<1x512xf32>
    %29 = vector.extract_strided_slice %24 {offsets = [0, 0], sizes = [32, 512], strides = [1, 1]} : vector<128x512xf32> to vector<32x512xf32>
    %30 = vector.broadcast %28 : vector<1x512xf32> to vector<32x512xf32>
    %31 = arith.mulf %30, %29 : vector<32x512xf32>
    %32 = arith.addf %26, %31 : vector<32x512xf32>
    %33 = vector.extract_strided_slice %1 {offsets = [1, 0], sizes = [1, 512], strides = [1, 1]} : vector<4x512xf32> to vector<1x512xf32>
    %34 = vector.extract_strided_slice %24 {offsets = [32, 0], sizes = [32, 512], strides = [1, 1]} : vector<128x512xf32> to vector<32x512xf32>
    %35 = vector.broadcast %33 : vector<1x512xf32> to vector<32x512xf32>
    %36 = arith.mulf %35, %34 : vector<32x512xf32>
    %37 = arith.addf %32, %36 : vector<32x512xf32>
    %38 = vector.extract_strided_slice %1 {offsets = [2, 0], sizes = [1, 512], strides = [1, 1]} : vector<4x512xf32> to vector<1x512xf32>
    %39 = vector.extract_strided_slice %24 {offsets = [64, 0], sizes = [32, 512], strides = [1, 1]} : vector<128x512xf32> to vector<32x512xf32>
    %40 = vector.broadcast %38 : vector<1x512xf32> to vector<32x512xf32>
    %41 = arith.mulf %40, %39 : vector<32x512xf32>
    %42 = arith.addf %37, %41 : vector<32x512xf32>
    %43 = vector.extract_strided_slice %1 {offsets = [3, 0], sizes = [1, 512], strides = [1, 1]} : vector<4x512xf32> to vector<1x512xf32>
    %44 = vector.extract_strided_slice %24 {offsets = [96, 0], sizes = [32, 512], strides = [1, 1]} : vector<128x512xf32> to vector<32x512xf32>
    %45 = vector.broadcast %43 : vector<1x512xf32> to vector<32x512xf32>
    %46 = arith.mulf %45, %44 : vector<32x512xf32>
    %47 = arith.addf %42, %46 : vector<32x512xf32>
    %cst_19 = arith.constant 0.000000e+00 : f32
    %48 = vector.broadcast %cst_19 : f32 to vector<32x512xf32>
    %49 = arith.maximumf %47, %48 : vector<32x512xf32>
    %50 = arith.mulf %49, %25 : vector<32x512xf32>
    %cst_20 = arith.constant dense<0.000000e+00> : vector<512xf32>
    %51 = vector.multi_reduction <add>, %50, %cst_20 [0] : vector<32x512xf32> to vector<512xf32>
    %52 = vector.shape_cast %51 : vector<512xf32> to vector<1x512xf32>
    %53 = arith.addf %52, %27 : vector<1x512xf32>
    %c0_21 = arith.constant 0 : index
    %c0_22 = arith.constant 0 : index
    %54 = vector.load %arg9[%c0_21, %c0_22] : memref<1x512xf32, #tpu.memory_space<vmem>>, vector<1x512xf32>
    tpu.vector_store %arg9[%c0_21, %c0_22], %53 {strides = array<i32>} : memref<1x512xf32, #tpu.memory_space<vmem>>, vector<1x512xf32>,
    return
  }
  func.func @transform_0(%arg0: i32) -> (i32, i32) {
    %c0_i32 = arith.constant 0 : i32
    %c0_i32_0 = arith.constant 0 : i32
    return %c0_i32, %arg0 : i32, i32
  }
  func.func @transform_1(%arg0: i32) -> (i32, i32) {
    %c0_i32 = arith.constant 0 : i32
    %c0_i32_0 = arith.constant 0 : i32
    return %c0_i32, %arg0 : i32, i32
  }
  func.func @transform_2(%arg0: i32) -> (i32, i32) {
    %c0_i32 = arith.constant 0 : i32
    %c0_i32_0 = arith.constant 0 : i32
    %c0_i32_1 = arith.constant 0 : i32
    return %c0_i32, %c0_i32_0 : i32, i32
  }
  func.func @transform_3(%arg0: i32) -> (i32, i32) {
    %c0_i32 = arith.constant 0 : i32
    %c0_i32_0 = arith.constant 0 : i32
    %c0_i32_1 = arith.constant 0 : i32
    return %c0_i32, %c0_i32_0 : i32, i32
  }
  func.func @transform_4(%arg0: i32) -> (i32, i32) {
    %c0_i32 = arith.constant 0 : i32
    %c0_i32_0 = arith.constant 0 : i32
    %c0_i32_1 = arith.constant 0 : i32
    return %c0_i32, %c0_i32_0 : i32, i32
  }
  func.func @transform_5(%arg0: i32) -> (i32, i32) {
    %c0_i32 = arith.constant 0 : i32
    %c0_i32_0 = arith.constant 0 : i32
    %c0_i32_1 = arith.constant 0 : i32
    return %c0_i32, %c0_i32_0 : i32, i32
  }
  func.func @transform_6(%arg0: i32) -> (i32, i32) {
    %c0_i32 = arith.constant 0 : i32
    %c0_i32_0 = arith.constant 0 : i32
    %c0_i32_1 = arith.constant 0 : i32
    return %c0_i32, %c0_i32_0 : i32, i32
  }
  func.func @transform_7(%arg0: i32) -> (i32, i32) {
    %c0_i32 = arith.constant 0 : i32
    %c0_i32_0 = arith.constant 0 : i32
    %c0_i32_1 = arith.constant 0 : i32
    return %c0_i32, %c0_i32_0 : i32, i32
  }
  func.func @transform_8(%arg0: i32) -> (i32, i32) {
    %c0_i32 = arith.constant 0 : i32
    %c0_i32_0 = arith.constant 0 : i32
    return %c0_i32, %arg0 : i32, i32
  }
}

</mosaic_0001>

<llo_original>
// kernel: tpu_custom_call.1
$region0: #{tpu_custom_call.1}
  #allocation0 [shape = 'u32[]', space=smem, size = 0x4, offset = 0x4, fixed_abs, tag = 'smem constant byte address 0x4 - core index']
  #allocation1 [shape = 'u32[144,128]{1,0:T(1,128)}', space=vmem, size = 0x12000, scoped, tag = 'internal scratch']
  %s0 = inlined_call_operand.vmem [shape: f32[4,1024], index: 0, kind: input, shape index: {}]
  %s1 = inlined_call_operand.vmem [shape: f32[16,1024], index: 1, kind: input, shape index: {}]
  %s2 = inlined_call_operand.vmem [shape: f32[256,16], index: 2, kind: input, shape index: {}]
  %s3 = inlined_call_operand.vmem [shape: f32[256,1], index: 3, kind: input, shape index: {}]
  %s4 = inlined_call_operand.vmem [shape: f32[128,128], index: 4, kind: input, shape index: {}]
  %s5 = inlined_call_operand.vmem [shape: f32[128,1], index: 5, kind: input, shape index: {}]
  %s6 = inlined_call_operand.vmem [shape: f32[200,256], index: 6, kind: input, shape index: {}]
  %s7 = inlined_call_operand.vmem [shape: f32[200,1], index: 7, kind: input, shape index: {}]
  %s8 = inlined_call_operand.hbm [shape: f32[1,1024], index: 8, kind: output, shape index: {}]
  %s9 = sld [smem:[#allocation0]]
  $region88: #{tpu_custom_call.1} parent=0
    _
  %s11 = ssub.s32 1, %s9
  %s12 = scalar_select 0, %s11, %s9
  $region1: #{tpu_custom_call.1} parent=0
    #allocation2 [shape = 'u8[65536]{0}', space=vmem, size = 0x10000, scoped, tag = 'input window, operand 1']
    #allocation3 [shape = 'u8[4096]{0}', space=vmem, size = 0x1000, scoped, tag = 'output window, operand 0']
    #allocation4 [shape = 's32[2]{0}', space=sflag, size = 0x8, scoped, tag = 'scoped memory for tpu_custom_call.1']
    %13 = vsyncpa [#allocation4], 0
    %s14 = scalar_lea.sflag [#allocation4], 1
    %15 = vsyncpa %s14, 0
    loop: start=0, step=1, limit=4
    $region2: #{tpu_custom_call.1} parent=1 // loop_pre_header
      _
    $region3: #{tpu_custom_call.1} parent=1 // loop_header
      %s17 = sphi 0, %s21
      %p18 = scmp.ge.s32.totalorder %s17, 4
      %s27 = sphi 0, %s29
      %s30 = sphi 0, %s27
      %s31 = sphi 0, %s30
      %s47 = sphi 0, %s31
      %s53 = sphi 0, %s55
      %s56 = sphi 0, %s53
      %s57 = sphi 0, %s56
      %s73 = sphi 0, %s57
      %s77 = sphi 0, %s77
      %s79 = sphi 0, %s77
      %s80 = sphi 0, %s79
      %s94 = sphi 0, %s80
      %s98 = sphi 0, %s98
      %s100 = sphi 0, %s98
      %s101 = sphi 0, %s100
      %s115 = sphi 0, %s101
      %s119 = sphi 0, %s119
      %s121 = sphi 0, %s119
      %s122 = sphi 0, %s121
      %s136 = sphi 0, %s122
      %s140 = sphi 0, %s140
      %s142 = sphi 0, %s140
      %s143 = sphi 0, %s142
      %s157 = sphi 0, %s143
      %s161 = sphi 0, %s161
      %s163 = sphi 0, %s161
      %s164 = sphi 0, %s163
      %s178 = sphi 0, %s164
      %s182 = sphi 0, %s182
      %s184 = sphi 0, %s182
      %s185 = sphi 0, %s184
      %s199 = sphi 0, %s185
      %s205 = sphi 0, %s207
      %s208 = sphi 0, %s205
      %s209 = sphi 0, %s208
      %s225 = sphi 0, %s209
    $region4: #{tpu_custom_call.1} parent=1 // loop_header_branch
      %20 = sbr.rel (%p18) target = $region8
    $region5: #{tpu_custom_call.1} parent=1 // loop_body
      %s22 = ssub.s32 %s17, 1
      %s23 = ssub.s32 %s17, 2
      %s24 = sadd.s32 %s17, 1
      %s25 = ssub.s32 %s17, %s24
      %p26 = scmp.eq.s32.totalorder %s25, 0
      %s28 = sadd.s32 %s27, 1
      %s29 = scalar_select %p26, %s27, %s28
      %p32 = pneg %p26
      %p33 = scmp.eq.s32.totalorder %s17, 1
      %p34 = por %p32, %p33
      %p35 = scmp.ne.s32.totalorder %s27, %s30
      %p36 = scmp.eq.s32.totalorder %s17, 0
      %p37 = por %p35, %p36
      %p38 = scmp.ne.s32.totalorder %s27, %s30
      %p39 = scmp.eq.s32.totalorder %s22, 1
      %p40 = por %p38, %p39
      %p41 = scmp.ne.s32.totalorder %s30, %s31
      %p42 = scmp.eq.s32.totalorder %s22, 0
      %p43 = por %p41, %p42
      %p44 = scmp.ne.s32.totalorder %s30, %s31
      %p45 = scmp.eq.s32.totalorder %s23, 1
      %p46 = por %p44, %p45
      %p48 = scmp.ne.s32.totalorder %s31, %s47
      %p49 = scmp.eq.s32.totalorder %s23, 0
      %p50 = por %p48, %p49
      %s51 = ssub.s32 %s17, %s24
      %p52 = scmp.eq.s32.totalorder %s51, 0
      %s54 = sadd.s32 %s53, 1
      %s55 = scalar_select %p52, %s53, %s54
      %p58 = pneg %p52
      %p59 = scmp.eq.s32.totalorder %s17, 1
      %p60 = por %p58, %p59
      %p61 = scmp.ne.s32.totalorder %s53, %s56
      %p62 = scmp.eq.s32.totalorder %s17, 0
      %p63 = por %p61, %p62
      %p64 = scmp.ne.s32.totalorder %s53, %s56
      %p65 = scmp.eq.s32.totalorder %s22, 1
      %p66 = por %p64, %p65
      %p67 = scmp.ne.s32.totalorder %s56, %s57
      %p68 = scmp.eq.s32.totalorder %s22, 0
      %p69 = por %p67, %p68
      %p70 = scmp.ne.s32.totalorder %s56, %s57
      %p71 = scmp.eq.s32.totalorder %s23, 1
      %p72 = por %p70, %p71
      %p74 = scmp.ne.s32.totalorder %s57, %s73
      %p75 = scmp.eq.s32.totalorder %s23, 0
      %p76 = por %p74, %p75
      %s78 = sadd.s32 %s77, 1
      %p81 = scmp.eq.s32.totalorder %s17, 1
      %p82 = scmp.ne.s32.totalorder %s77, %s79
      %p83 = scmp.eq.s32.totalorder %s17, 0
      %p84 = por %p82, %p83
      %p85 = scmp.ne.s32.totalorder %s77, %s79
      %p86 = scmp.eq.s32.totalorder %s22, 1
      %p87 = por %p85, %p86
      %p88 = scmp.ne.s32.totalorder %s79, %s80
      %p89 = scmp.eq.s32.totalorder %s22, 0
      %p90 = por %p88, %p89
      %p91 = scmp.ne.s32.totalorder %s79, %s80
      %p92 = scmp.eq.s32.totalorder %s23, 1
      %p93 = por %p91, %p92
      %p95 = scmp.ne.s32.totalorder %s80, %s94
      %p96 = scmp.eq.s32.totalorder %s23, 0
      %p97 = por %p95, %p96
      %s99 = sadd.s32 %s98, 1
      %p102 = scmp.eq.s32.totalorder %s17, 1
      %p103 = scmp.ne.s32.totalorder %s98, %s100
      %p104 = scmp.eq.s32.totalorder %s17, 0
      %p105 = por %p103, %p104
      %p106 = scmp.ne.s32.totalorder %s98, %s100
      %p107 = scmp.eq.s32.totalorder %s22, 1
      %p108 = por %p106, %p107
      %p109 = scmp.ne.s32.totalorder %s100, %s101
      %p110 = scmp.eq.s32.totalorder %s22, 0
      %p111 = por %p109, %p110
      %p112 = scmp.ne.s32.totalorder %s100, %s101
      %p113 = scmp.eq.s32.totalorder %s23, 1
      %p114 = por %p112, %p113
      %p116 = scmp.ne.s32.totalorder %s101, %s115
      %p117 = scmp.eq.s32.totalorder %s23, 0
      %p118 = por %p116, %p117
      %s120 = sadd.s32 %s119, 1
      %p123 = scmp.eq.s32.totalorder %s17, 1
      %p124 = scmp.ne.s32.totalorder %s119, %s121
      %p125 = scmp.eq.s32.totalorder %s17, 0
      %p126 = por %p124, %p125
      %p127 = scmp.ne.s32.totalorder %s119, %s121
      %p128 = scmp.eq.s32.totalorder %s22, 1
      %p129 = por %p127, %p128
      %p130 = scmp.ne.s32.totalorder %s121, %s122
      %p131 = scmp.eq.s32.totalorder %s22, 0
      %p132 = por %p130, %p131
      %p133 = scmp.ne.s32.totalorder %s121, %s122
      %p134 = scmp.eq.s32.totalorder %s23, 1
      %p135 = por %p133, %p134
      %p137 = scmp.ne.s32.totalorder %s122, %s136
      %p138 = scmp.eq.s32.totalorder %s23, 0
      %p139 = por %p137, %p138
      %s141 = sadd.s32 %s140, 1
      %p144 = scmp.eq.s32.totalorder %s17, 1
      %p145 = scmp.ne.s32.totalorder %s140, %s142
      %p146 = scmp.eq.s32.totalorder %s17, 0
      %p147 = por %p145, %p146
      %p148 = scmp.ne.s32.totalorder %s140, %s142
      %p149 = scmp.eq.s32.totalorder %s22, 1
      %p150 = por %p148, %p149
      %p151 = scmp.ne.s32.totalorder %s142, %s143
      %p152 = scmp.eq.s32.totalorder %s22, 0
      %p153 = por %p151, %p152
      %p154 = scmp.ne.s32.totalorder %s142, %s143
      %p155 = scmp.eq.s32.totalorder %s23, 1
      %p156 = por %p154, %p155
      %p158 = scmp.ne.s32.totalorder %s143, %s157
      %p159 = scmp.eq.s32.totalorder %s23, 0
      %p160 = por %p158, %p159
      %s162 = sadd.s32 %s161, 1
      %p165 = scmp.eq.s32.totalorder %s17, 1
      %p166 = scmp.ne.s32.totalorder %s161, %s163
      %p167 = scmp.eq.s32.totalorder %s17, 0
      %p168 = por %p166, %p167
      %p169 = scmp.ne.s32.totalorder %s161, %s163
      %p170 = scmp.eq.s32.totalorder %s22, 1
      %p171 = por %p169, %p170
      %p172 = scmp.ne.s32.totalorder %s163, %s164
      %p173 = scmp.eq.s32.totalorder %s22, 0
      %p174 = por %p172, %p173
      %p175 = scmp.ne.s32.totalorder %s163, %s164
      %p176 = scmp.eq.s32.totalorder %s23, 1
      %p177 = por %p175, %p176
      %p179 = scmp.ne.s32.totalorder %s164, %s178
      %p180 = scmp.eq.s32.totalorder %s23, 0
      %p181 = por %p179, %p180
      %s183 = sadd.s32 %s182, 1
      %p186 = scmp.eq.s32.totalorder %s17, 1
      %p187 = scmp.ne.s32.totalorder %s182, %s184
      %p188 = scmp.eq.s32.totalorder %s17, 0
      %p189 = por %p187, %p188
      %p190 = scmp.ne.s32.totalorder %s182, %s184
      %p191 = scmp.eq.s32.totalorder %s22, 1
      %p192 = por %p190, %p191
      %p193 = scmp.ne.s32.totalorder %s184, %s185
      %p194 = scmp.eq.s32.totalorder %s22, 0
      %p195 = por %p193, %p194
      %p196 = scmp.ne.s32.totalorder %s184, %s185
      %p197 = scmp.eq.s32.totalorder %s23, 1
      %p198 = por %p196, %p197
      %p200 = scmp.ne.s32.totalorder %s185, %s199
      %p201 = scmp.eq.s32.totalorder %s23, 0
      %p202 = por %p200, %p201
      %s203 = ssub.s32 %s17, %s24
      %p204 = scmp.eq.s32.totalorder %s203, 0
      %s206 = sadd.s32 %s205, 1
      %s207 = scalar_select %p204, %s205, %s206
      %p210 = pneg %p204
      %p211 = scmp.eq.s32.totalorder %s17, 1
      %p212 = por %p210, %p211
      %p213 = scmp.ne.s32.totalorder %s205, %s208
      %p214 = scmp.eq.s32.totalorder %s17, 0
      %p215 = por %p213, %p214
      %p216 = scmp.ne.s32.totalorder %s205, %s208
      %p217 = scmp.eq.s32.totalorder %s22, 1
      %p218 = por %p216, %p217
      %p219 = scmp.ne.s32.totalorder %s208, %s209
      %p220 = scmp.eq.s32.totalorder %s22, 0
      %p221 = por %p219, %p220
      %p222 = scmp.ne.s32.totalorder %s208, %s209
      %p223 = scmp.eq.s32.totalorder %s23, 1
      %p224 = por %p222, %p223
      %p226 = scmp.ne.s32.totalorder %s209, %s225
      %p227 = scmp.eq.s32.totalorder %s23, 0
      %p228 = por %p226, %p227
      %p229 = scmp.le.s32.totalorder 1, %s17
      %p230 = scmp.lt.s32.totalorder %s17, 3
      %p231 = pnand %p229, %p230
      %p232 = pneg %p231
      // Predicated region
      $region9: #{tpu_custom_call.1} parent=5 // pred_check
        _
      $region10: #{tpu_custom_call.1} parent=5 // pred_check_branch
        %234 = sbr.rel (%p231) target = $region12
      $region11: #{tpu_custom_call.1} parent=5 // pred_region
        %s235 = ssub.s32 %s17, 1
        // Predicated region
        $region13: #{tpu_custom_call.1} parent=11 // pred_check
          %p236 = pneg %p90
        $region14: #{tpu_custom_call.1} parent=11 // pred_check_branch
          %238 = sbr.rel (%p236) target = $region16
        $region15: #{tpu_custom_call.1} parent=11 // pred_region
          _
        $region16: #{tpu_custom_call.1} parent=11 // pred_fallthru
          _
        // Predicated region
        $region17: #{tpu_custom_call.1} parent=11 // pred_check
          %p239 = pneg %p111
        $region18: #{tpu_custom_call.1} parent=11 // pred_check_branch
          %241 = sbr.rel (%p239) target = $region20
        $region19: #{tpu_custom_call.1} parent=11 // pred_region
          _
        $region20: #{tpu_custom_call.1} parent=11 // pred_fallthru
          _
        // Predicated region
        $region21: #{tpu_custom_call.1} parent=11 // pred_check
          %p242 = pneg %p132
        $region22: #{tpu_custom_call.1} parent=11 // pred_check_branch
          %244 = sbr.rel (%p242) target = $region24
        $region23: #{tpu_custom_call.1} parent=11 // pred_region
          _
        $region24: #{tpu_custom_call.1} parent=11 // pred_fallthru
          _
        // Predicated region
        $region25: #{tpu_custom_call.1} parent=11 // pred_check
          %p245 = pneg %p153
        $region26: #{tpu_custom_call.1} parent=11 // pred_check_branch
          %247 = sbr.rel (%p245) target = $region28
        $region27: #{tpu_custom_call.1} parent=11 // pred_region
          _
        $region28: #{tpu_custom_call.1} parent=11 // pred_fallthru
          _
        // Predicated region
        $region29: #{tpu_custom_call.1} parent=11 // pred_check
          %p248 = pneg %p174
        $region30: #{tpu_custom_call.1} parent=11 // pred_check_branch
          %250 = sbr.rel (%p248) target = $region32
        $region31: #{tpu_custom_call.1} parent=11 // pred_region
          _
        $region32: #{tpu_custom_call.1} parent=11 // pred_fallthru
          _
        // Predicated region
        $region33: #{tpu_custom_call.1} parent=11 // pred_check
          %p251 = pneg %p195
        $region34: #{tpu_custom_call.1} parent=11 // pred_check_branch
          %253 = sbr.rel (%p251) target = $region36
        $region35: #{tpu_custom_call.1} parent=11 // pred_region
          _
        $region36: #{tpu_custom_call.1} parent=11 // pred_fallthru
          _
      $region12: #{tpu_custom_call.1} parent=5 // pred_fallthru
        _
      %p254 = scmp.lt.s32.totalorder %s17, 2
      // Predicated region
      $region37: #{tpu_custom_call.1} parent=5 // pred_check
        %p255 = pneg %p254
      $region38: #{tpu_custom_call.1} parent=5 // pred_check_branch
        %257 = sbr.rel (%p255) target = $region40
      $region39: #{tpu_custom_call.1} parent=5 // pred_region
        // Predicated region
        $region41: #{tpu_custom_call.1} parent=39 // pred_check
          %p258 = pneg %p37
        $region42: #{tpu_custom_call.1} parent=39 // pred_check_branch
          %260 = sbr.rel (%p258) target = $region44
        $region43: #{tpu_custom_call.1} parent=39 // pred_region
          %s261 = smul.u32 4, %s17
          %p262 = scmp.lt.s32.totalorder %s261, 7
          %s263 = scalar_select %p262, %s261, 7
          %s264 = smul.addr %s263, 4
          %s265 = scalar_lea.vmem %s0, %s264
          %s266 = smul.u32 4, %s17
        $region44: #{tpu_custom_call.1} parent=39 // pred_fallthru
          _
        // Predicated region
        $region45: #{tpu_custom_call.1} parent=39 // pred_check
          %p267 = pneg %p63
        $region46: #{tpu_custom_call.1} parent=39 // pred_check_branch
          %269 = sbr.rel (%p267) target = $region48
        $region47: #{tpu_custom_call.1} parent=39 // pred_region
          %s270 = sand.u32 %s53, 1
          %s271 = sand.u32 %s53, 1
          %s272 = smul.addr %s271, 64
          %s273 = scalar_lea.vmem [#allocation2], %s272
          %s274 = smul.u32 4, %s17
          %s275 = smul.addr %s274, 8
          %s276 = scalar_lea.vmem %s1, %s275
          // Predicated region
          $region49: #{tpu_custom_call.1} parent=47 // pred_check
            _
          $region50: #{tpu_custom_call.1} parent=47 // pred_check_branch
            %278 = sbr.rel (0) target = $region52
          $region51: #{tpu_custom_call.1} parent=47 // pred_region
            // Predicated region
            $region53: #{tpu_custom_call.1} parent=51 // pred_check
              _
            $region54: #{tpu_custom_call.1} parent=51 // pred_check_branch
              %280 = sbr.rel (0) target = $region56
            $region55: #{tpu_custom_call.1} parent=51 // pred_region
              loop: start=0, step=1, limit=1
              $region57: #{tpu_custom_call.1} parent=55 // loop_pre_header
                _
              $region58: #{tpu_custom_call.1} parent=55 // loop_header
                %s282 = sphi 0, %s286
                %p283 = scmp.ge.s32.totalorder %s282, 1
                %s287 = sphi %s276, %s276
                %s288 = sphi %s273, %s273
              $region59: #{tpu_custom_call.1} parent=55 // loop_header_branch
                %285 = sbr.rel (%p283) target = $region63
              $region60: #{tpu_custom_call.1} parent=55 // loop_body
                %v289 = vld [vmem:[%s287] sm:$0xff]
                %290 = vst [vmem:[%s288] sm:$0xff] %v289
                %v291 = vld [vmem:[%s287 + $0x8] sm:$0xff]
                %292 = vst [vmem:[%s288 + $0x8] sm:$0xff] %v291
                %v293 = vld [vmem:[%s287 + $0x10] sm:$0xff]
                %294 = vst [vmem:[%s288 + $0x10] sm:$0xff] %v293
                %v295 = vld [vmem:[%s287 + $0x18] sm:$0xff]
                %296 = vst [vmem:[%s288 + $0x18] sm:$0xff] %v295
                %v297 = vld [vmem:[%s287 + $0x40] sm:$0xff]
                %298 = vst [vmem:[%s288 + $0x20] sm:$0xff] %v297
                %v299 = vld [vmem:[%s287 + $0x48] sm:$0xff]
                %300 = vst [vmem:[%s288 + $0x28] sm:$0xff] %v299
                %v301 = vld [vmem:[%s287 + $0x50] sm:$0xff]
                %302 = vst [vmem:[%s288 + $0x30] sm:$0xff] %v301
                %v303 = vld [vmem:[%s287 + $0x58] sm:$0xff]
                %304 = vst [vmem:[%s288 + $0x38] sm:$0xff] %v303
              $region61: #{tpu_custom_call.1} parent=55 // loop_footer
                %s286 = sadd.s32 1, %s282
              $region62: #{tpu_custom_call.1} parent=55 // loop_footer_branch
                %281 = sbr.rel target = $region58
              $region63: #{tpu_custom_call.1} parent=55 // loop_exit
                _
            $region56: #{tpu_custom_call.1} parent=51 // pred_fallthru
              _
            // Predicated region
            $region64: #{tpu_custom_call.1} parent=51 // pred_check
              _
            $region65: #{tpu_custom_call.1} parent=51 // pred_check_branch
              %306 = sbr.rel target = $region67
            $region66: #{tpu_custom_call.1} parent=51 // pred_region
              _
            $region67: #{tpu_custom_call.1} parent=51 // pred_fallthru
              _
          $region52: #{tpu_custom_call.1} parent=47 // pred_fallthru
            _
          %307 = vnop
        $region48: #{tpu_custom_call.1} parent=39 // pred_fallthru
          _
      $region40: #{tpu_custom_call.1} parent=5 // pred_fallthru
        _
      %p308 = scmp.le.s32.totalorder 1, %s17
      %p309 = scmp.lt.s32.totalorder %s17, 3
      %p310 = pnand %p308, %p309
      %p311 = pneg %p310
      // Predicated region
      $region68: #{tpu_custom_call.1} parent=5 // pred_check
        _
      $region69: #{tpu_custom_call.1} parent=5 // pred_check_branch
        %313 = sbr.rel (%p310) target = $region71
      $region70: #{tpu_custom_call.1} parent=5 // pred_region
        %s314 = ssub.s32 %s17, 1
        %s315 = sand.u32 %s56, 1
        %s316 = sand.u32 %s56, 1
        %s317 = smul.addr %s316, 64
        %s318 = scalar_lea.vmem [#allocation2], %s317
        // Predicated region
        $region72: #{tpu_custom_call.1} parent=70 // pred_check
          %p319 = pneg %p69
        $region73: #{tpu_custom_call.1} parent=70 // pred_check_branch
          %321 = sbr.rel (%p319) target = $region75
        $region74: #{tpu_custom_call.1} parent=70 // pred_region
          _
        $region75: #{tpu_custom_call.1} parent=70 // pred_fallthru
          _
        %s322 = smul.u32 4, %s22
        %p323 = scmp.lt.s32.totalorder %s322, 7
        %s324 = scalar_select %p323, %s322, 7
        %s325 = smul.addr %s324, 4
        %s326 = scalar_lea.vmem %s0, %s325
        %p327 = pneg %p43
        %p328 = pneg %p40
        %s329 = sand.u32 %s56, 1
        %s330 = sand.u32 %s56, 1
        %s331 = smul.addr %s330, 64
        %s332 = scalar_lea.vmem [#allocation2], %s331
        %p333 = pneg %p69
        %p334 = pneg %p66
        %p335 = pneg %p90
        %p336 = pneg %p87
        %p337 = pneg %p111
        %p338 = pneg %p108
        %p339 = pneg %p132
        %p340 = pneg %p129
        %p341 = pneg %p153
        %p342 = pneg %p150
        %p343 = pneg %p174
        %p344 = pneg %p171
        %p345 = pneg %p195
        %p346 = pneg %p192
        %p347 = pneg %p221
        %p348 = pneg %p218
        %s349 = sand.u32 %s208, 1
        %s350 = scalar_lea.sflag [#allocation4], %s349
        %s351 = sand.u32 %s208, 1
        %s352 = smul.addr %s351, 4
        %s353 = scalar_lea.vmem [#allocation3], %s352
        %s354 = smul.u32 4, %s22
        %p355 = scmp.lt.s32.totalorder %s354, 7
        %s356 = scalar_select %p355, %s354, 7
        %s357 = smul.addr %s356, 4
        %s358 = scalar_lea.vmem %s0, %s357
        %s359 = smul.u32 4, %s22
        %s360 = smul.u32 4, %s22
        %s361 = smul.u32 4, %s22
        %v362 = vld [vmem:[%s318] sm:$0xff]
        %v363 = vld [vmem:[%s318 + $0x8] sm:$0xff]
        %v364 = vld [vmem:[%s318 + $0x10] sm:$0xff]
        %v365 = vld [vmem:[%s318 + $0x18] sm:$0xff]
        %v366 = vld [vmem:[%s318 + $0x20] sm:$0xff]
        %v367 = vld [vmem:[%s318 + $0x28] sm:$0xff]
        %v368 = vld [vmem:[%s318 + $0x30] sm:$0xff]
        %v369 = vld [vmem:[%s318 + $0x38] sm:$0xff]
        %v370 = vld [vmem:[%s358] sm:$0xff]
        %v371 = vld [vmem:[%s358 + $0x8] sm:$0xff]
        %v372 = vld [vmem:[%s2] sm:$0xff]
        %v373 = vld [vmem:[%s2 + $0x8] sm:$0xff]
        %v374 = vld [vmem:[%s2 + $0x10] sm:$0xff]
        %v375 = vld [vmem:[%s2 + $0x18] sm:$0xff]
        %v376 = vld [vmem:[%s2 + $0x20] sm:$0xff]
        %v377 = vld [vmem:[%s2 + $0x28] sm:$0xff]
        %v378 = vld [vmem:[%s2 + $0x30] sm:$0xff]
        %v379 = vld [vmem:[%s2 + $0x38] sm:$0xff]
        %v380 = vld [vmem:[%s2 + $0x40] sm:$0xff]
        %v381 = vld [vmem:[%s2 + $0x48] sm:$0xff]
        %v382 = vld [vmem:[%s2 + $0x50] sm:$0xff]
        %v383 = vld [vmem:[%s2 + $0x58] sm:$0xff]
        %v384 = vld [vmem:[%s2 + $0x60] sm:$0xff]
        %v385 = vld [vmem:[%s2 + $0x68] sm:$0xff]
        %v386 = vld [vmem:[%s2 + $0x70] sm:$0xff]
        %v387 = vld [vmem:[%s2 + $0x78] sm:$0xff]
        %v388 = vld [vmem:[%s2 + $0x80] sm:$0xff]
        %v389 = vld [vmem:[%s2 + $0x88] sm:$0xff]
        %v390 = vld [vmem:[%s2 + $0x90] sm:$0xff]
        %v391 = vld [vmem:[%s2 + $0x98] sm:$0xff]
        %v392 = vld [vmem:[%s2 + $0xa0] sm:$0xff]
        %v393 = vld [vmem:[%s2 + $0xa8] sm:$0xff]
        %v394 = vld [vmem:[%s2 + $0xb0] sm:$0xff]
        %v395 = vld [vmem:[%s2 + $0xb8] sm:$0xff]
        %v396 = vld [vmem:[%s2 + $0xc0] sm:$0xff]
        %v397 = vld [vmem:[%s2 + $0xc8] sm:$0xff]
        %v398 = vld [vmem:[%s2 + $0xd0] sm:$0xff]
        %v399 = vld [vmem:[%s2 + $0xd8] sm:$0xff]
        %v400 = vld [vmem:[%s2 + $0xe0] sm:$0xff]
        %v401 = vld [vmem:[%s2 + $0xe8] sm:$0xff]
        %v402 = vld [vmem:[%s2 + $0xf0] sm:$0xff]
        %v403 = vld [vmem:[%s2 + $0xf8] sm:$0xff]
        %v404 = vld [vmem:[%s3] sm:$0xff]
        %v405 = vld [vmem:[%s3 + $0x8] sm:$0xff]
        %v406 = vld [vmem:[%s3 + $0x10] sm:$0xff]
        %v407 = vld [vmem:[%s3 + $0x18] sm:$0xff]
        %v408 = vld [vmem:[%s3 + $0x20] sm:$0xff]
        %v409 = vld [vmem:[%s3 + $0x28] sm:$0xff]
        %v410 = vld [vmem:[%s3 + $0x30] sm:$0xff]
        %v411 = vld [vmem:[%s3 + $0x38] sm:$0xff]
        %v412 = vld [vmem:[%s3 + $0x40] sm:$0xff]
        %v413 = vld [vmem:[%s3 + $0x48] sm:$0xff]
        %v414 = vld [vmem:[%s3 + $0x50] sm:$0xff]
        %v415 = vld [vmem:[%s3 + $0x58] sm:$0xff]
        %v416 = vld [vmem:[%s3 + $0x60] sm:$0xff]
        %v417 = vld [vmem:[%s3 + $0x68] sm:$0xff]
        %v418 = vld [vmem:[%s3 + $0x70] sm:$0xff]
        %v419 = vld [vmem:[%s3 + $0x78] sm:$0xff]
        %v420 = vld [vmem:[%s3 + $0x80] sm:$0xff]
        %v421 = vld [vmem:[%s3 + $0x88] sm:$0xff]
        %v422 = vld [vmem:[%s3 + $0x90] sm:$0xff]
        %v423 = vld [vmem:[%s3 + $0x98] sm:$0xff]
        %v424 = vld [vmem:[%s3 + $0xa0] sm:$0xff]
        %v425 = vld [vmem:[%s3 + $0xa8] sm:$0xff]
        %v426 = vld [vmem:[%s3 + $0xb0] sm:$0xff]
        %v427 = vld [vmem:[%s3 + $0xb8] sm:$0xff]
        %v428 = vld [vmem:[%s3 + $0xc0] sm:$0xff]
        %v429 = vld [vmem:[%s3 + $0xc8] sm:$0xff]
        %v430 = vld [vmem:[%s3 + $0xd0] sm:$0xff]
        %v431 = vld [vmem:[%s3 + $0xd8] sm:$0xff]
        %v432 = vld [vmem:[%s3 + $0xe0] sm:$0xff]
        %v433 = vld [vmem:[%s3 + $0xe8] sm:$0xff]
        %v434 = vld [vmem:[%s3 + $0xf0] sm:$0xff]
        %v435 = vld [vmem:[%s3 + $0xf8] sm:$0xff]
        %437 = vset.pattern.permute.xlu0 0
        %438 = vperm.xlu0 %437, %v404
        %v439 = vpop.permute.xlu0 %438
        %442 = vset.pattern.permute.xlu0 0
        %443 = vperm.xlu0 %442, %v405
        %v444 = vpop.permute.xlu0 %443
        %447 = vset.pattern.permute.xlu0 0
        %448 = vperm.xlu0 %447, %v406
        %v449 = vpop.permute.xlu0 %448
        %452 = vset.pattern.permute.xlu0 0
        %453 = vperm.xlu0 %452, %v407
        %v454 = vpop.permute.xlu0 %453
        %457 = vset.pattern.permute.xlu0 0
        %458 = vperm.xlu0 %457, %v408
        %v459 = vpop.permute.xlu0 %458
        %462 = vset.pattern.permute.xlu0 0
        %463 = vperm.xlu0 %462, %v409
        %v464 = vpop.permute.xlu0 %463
        %467 = vset.pattern.permute.xlu0 0
        %468 = vperm.xlu0 %467, %v410
        %v469 = vpop.permute.xlu0 %468
        %472 = vset.pattern.permute.xlu0 0
        %473 = vperm.xlu0 %472, %v411
        %v474 = vpop.permute.xlu0 %473
        %477 = vset.pattern.permute.xlu0 0
        %478 = vperm.xlu0 %477, %v412
        %v479 = vpop.permute.xlu0 %478
        %482 = vset.pattern.permute.xlu0 0
        %483 = vperm.xlu0 %482, %v413
        %v484 = vpop.permute.xlu0 %483
        %487 = vset.pattern.permute.xlu0 0
        %488 = vperm.xlu0 %487, %v414
        %v489 = vpop.permute.xlu0 %488
        %492 = vset.pattern.permute.xlu0 0
        %493 = vperm.xlu0 %492, %v415
        %v494 = vpop.permute.xlu0 %493
        %497 = vset.pattern.permute.xlu0 0
        %498 = vperm.xlu0 %497, %v416
        %v499 = vpop.permute.xlu0 %498
        %502 = vset.pattern.permute.xlu0 0
        %503 = vperm.xlu0 %502, %v417
        %v504 = vpop.permute.xlu0 %503
        %507 = vset.pattern.permute.xlu0 0
        %508 = vperm.xlu0 %507, %v418
        %v509 = vpop.permute.xlu0 %508
        %512 = vset.pattern.permute.xlu0 0
        %513 = vperm.xlu0 %512, %v419
        %v514 = vpop.permute.xlu0 %513
        %517 = vset.pattern.permute.xlu0 0
        %518 = vperm.xlu0 %517, %v420
        %v519 = vpop.permute.xlu0 %518
        %522 = vset.pattern.permute.xlu0 0
        %523 = vperm.xlu0 %522, %v421
        %v524 = vpop.permute.xlu0 %523
        %527 = vset.pattern.permute.xlu0 0
        %528 = vperm.xlu0 %527, %v422
        %v529 = vpop.permute.xlu0 %528
        %532 = vset.pattern.permute.xlu0 0
        %533 = vperm.xlu0 %532, %v423
        %v534 = vpop.permute.xlu0 %533
        %537 = vset.pattern.permute.xlu0 0
        %538 = vperm.xlu0 %537, %v424
        %v539 = vpop.permute.xlu0 %538
        %542 = vset.pattern.permute.xlu0 0
        %543 = vperm.xlu0 %542, %v425
        %v544 = vpop.permute.xlu0 %543
        %547 = vset.pattern.permute.xlu0 0
        %548 = vperm.xlu0 %547, %v426
        %v549 = vpop.permute.xlu0 %548
        %552 = vset.pattern.permute.xlu0 0
        %553 = vperm.xlu0 %552, %v427
        %v554 = vpop.permute.xlu0 %553
        %557 = vset.pattern.permute.xlu0 0
        %558 = vperm.xlu0 %557, %v428
        %v559 = vpop.permute.xlu0 %558
        %562 = vset.pattern.permute.xlu0 0
        %563 = vperm.xlu0 %562, %v429
        %v564 = vpop.permute.xlu0 %563
        %567 = vset.pattern.permute.xlu0 0
        %568 = vperm.xlu0 %567, %v430
        %v569 = vpop.permute.xlu0 %568
        %572 = vset.pattern.permute.xlu0 0
        %573 = vperm.xlu0 %572, %v431
        %v574 = vpop.permute.xlu0 %573
        %577 = vset.pattern.permute.xlu0 0
        %578 = vperm.xlu0 %577, %v432
        %v579 = vpop.permute.xlu0 %578
        %582 = vset.pattern.permute.xlu0 0
        %583 = vperm.xlu0 %582, %v433
        %v584 = vpop.permute.xlu0 %583
        %587 = vset.pattern.permute.xlu0 0
        %588 = vperm.xlu0 %587, %v434
        %v589 = vpop.permute.xlu0 %588
        %592 = vset.pattern.permute.xlu0 0
        %593 = vperm.xlu0 %592, %v435
        %v594 = vpop.permute.xlu0 %593
        %vm596 = vcmask 130048
        %v598 = vsel %vm596, %v372, 0
        %v601 = vsel %vm596, %v373, 0
        %v604 = vsel %vm596, %v374, 0
        %v607 = vsel %vm596, %v375, 0
        %v610 = vsel %vm596, %v376, 0
        %v613 = vsel %vm596, %v377, 0
        %v616 = vsel %vm596, %v378, 0
        %v619 = vsel %vm596, %v379, 0
        %v622 = vsel %vm596, %v380, 0
        %v625 = vsel %vm596, %v381, 0
        %v628 = vsel %vm596, %v382, 0
        %v631 = vsel %vm596, %v383, 0
        %v634 = vsel %vm596, %v384, 0
        %v637 = vsel %vm596, %v385, 0
        %v640 = vsel %vm596, %v386, 0
        %v643 = vsel %vm596, %v387, 0
        %v646 = vsel %vm596, %v388, 0
        %v649 = vsel %vm596, %v389, 0
        %v652 = vsel %vm596, %v390, 0
        %v655 = vsel %vm596, %v391, 0
        %v658 = vsel %vm596, %v392, 0
        %v661 = vsel %vm596, %v393, 0
        %v664 = vsel %vm596, %v394, 0
        %v667 = vsel %vm596, %v395, 0
        %v670 = vsel %vm596, %v396, 0
        %v673 = vsel %vm596, %v397, 0
        %v676 = vsel %vm596, %v398, 0
        %v679 = vsel %vm596, %v399, 0
        %v682 = vsel %vm596, %v400, 0
        %v685 = vsel %vm596, %v401, 0
        %v688 = vsel %vm596, %v402, 0
        %v691 = vsel %vm596, %v403, 0
        %693 = vmatprep.subr.mxu0 %v363
        %694 = vmatpush1.msra.mxu0 %v362
        %695 = vmatprep.subr.mxu0 %v367
        %696 = vmatpush1.msra.mxu0 %v366
        %697 = vmatprep.subr.mxu0 0.0
        %698 = vmatpush1.msra.mxu0 0.0
        %699 = vmatprep.subr.mxu0 0.0
        %700 = vmatpush1.msra.mxu0 0.0
        %701 = vmatprep.subr.mxu0 0.0
        %702 = vmatpush1.msra.mxu0 0.0
        %703 = vmatprep.subr.mxu0 0.0
        %704 = vmatpush1.msra.mxu0 0.0
        %705 = vmatprep.subr.mxu0 0.0
        %706 = vmatpush1.msra.mxu0 0.0
        %707 = vmatprep.subr.mxu0 0.0
        %708 = vmatpush1.msra.mxu0 0.0
        %709 = vmatprep.subr.mxu0 0.0
        %710 = vmatpush1.msra.mxu0 0.0
        %711 = vmatprep.subr.mxu0 0.0
        %712 = vmatpush1.msra.mxu0 0.0
        %713 = vmatprep.subr.mxu0 0.0
        %714 = vmatpush1.msra.mxu0 0.0
        %715 = vmatprep.subr.mxu0 0.0
        %716 = vmatpush1.msra.mxu0 0.0
        %717 = vmatprep.subr.mxu0 0.0
        %718 = vmatpush1.msra.mxu0 0.0
        %719 = vmatprep.subr.mxu0 0.0
        %720 = vmatpush1.msra.mxu0 0.0
        %721 = vmatprep.subr.mxu0 0.0
        %722 = vmatpush1.msra.mxu0 0.0
        %723 = vmatprep.subr.mxu0 0.0
        %724 = vmatpush1.msra.mxu0 0.0
        %725 = vmatprep.subr.mxu0 0.0
        %726 = vmatpush1.msra.mxu0 0.0
        %727 = vmatprep.subr.mxu0 0.0
        %728 = vmatpush1.msra.mxu0 0.0
        %729 = vmatprep.subr.mxu0 0.0
        %730 = vmatpush1.msra.mxu0 0.0
        %731 = vmatprep.subr.mxu0 0.0
        %732 = vmatpush1.msra.mxu0 0.0
        %733 = vmatprep.subr.mxu0 0.0
        %734 = vmatpush1.msra.mxu0 0.0
        %735 = vmatprep.subr.mxu0 0.0
        %736 = vmatpush1.msra.mxu0 0.0
        %737 = vmatprep.subr.mxu0 0.0
        %738 = vmatpush1.msra.mxu0 0.0
        %739 = vmatprep.subr.mxu0 0.0
        %740 = vmatpush1.msra.mxu0 0.0
        %741 = vmatprep.subr.mxu0 0.0
        %742 = vmatpush1.msra.mxu0 0.0
        %743 = vmatprep.subr.mxu0 0.0
        %744 = vmatpush1.msra.mxu0 0.0
        %745 = vmatprep.subr.mxu0 0.0
        %746 = vmatpush1.msra.mxu0 0.0
        %747 = vmatprep.subr.mxu0 0.0
        %748 = vmatpush1.msra.mxu0 0.0
        %749 = vmatprep.subr.mxu0 0.0
        %750 = vmatpush1.msra.mxu0 0.0
        %751 = vmatprep.subr.mxu0 0.0
        %752 = vmatpush1.msra.mxu0 0.0
        %753 = vmatprep.subr.mxu0 0.0
        %754 = vmatpush1.msra.mxu0 0.0
        %755 = vmatprep.subr.mxu0 0.0
        %756 = vmatpush1.msra.mxu0 0.0
        %757 = vmatprep.mubr.f32.mxu0 0.0
        %758 = vmatmul.mubr.f32.gmra.mrb[0].mxu0 %v598
        %v759 = vpop.f32.mrb[0].mxu0
        %v760 = vadd.f32 %v439, %v759
        %v761 = vpop.f32.mrb[0].mxu0
        %v762 = vadd.f32 %v439, %v761
        %763 = vmatprep.mubr.f32.mxu0 0.0
        %764 = vmatmul.mubr.f32.gmra.mrb[0].mxu0 %v601
        %v765 = vpop.f32.mrb[0].mxu0
        %v766 = vadd.f32 %v444, %v765
        %v767 = vpop.f32.mrb[0].mxu0
        %v768 = vadd.f32 %v444, %v767
        %769 = vmatprep.mubr.f32.mxu0 0.0
        %770 = vmatmul.mubr.f32.gmra.mrb[0].mxu0 %v604
        %v771 = vpop.f32.mrb[0].mxu0
        %v772 = vadd.f32 %v449, %v771
        %v773 = vpop.f32.mrb[0].mxu0
        %v774 = vadd.f32 %v449, %v773
        %775 = vmatprep.mubr.f32.mxu0 0.0
        %776 = vmatmul.mubr.f32.gmra.mrb[0].mxu0 %v607
        %v777 = vpop.f32.mrb[0].mxu0
        %v778 = vadd.f32 %v454, %v777
        %v779 = vpop.f32.mrb[0].mxu0
        %v780 = vadd.f32 %v454, %v779
        %781 = vmatprep.mubr.f32.mxu0 0.0
        %782 = vmatmul.mubr.f32.gmra.mrb[0].mxu0 %v610
        %v783 = vpop.f32.mrb[0].mxu0
        %v784 = vadd.f32 %v459, %v783
        %v785 = vpop.f32.mrb[0].mxu0
        %v786 = vadd.f32 %v459, %v785
        %787 = vmatprep.mubr.f32.mxu0 0.0
        %788 = vmatmul.mubr.f32.gmra.mrb[0].mxu0 %v613
        %v789 = vpop.f32.mrb[0].mxu0
        %v790 = vadd.f32 %v464, %v789
        %v791 = vpop.f32.mrb[0].mxu0
        %v792 = vadd.f32 %v464, %v791
        %793 = vmatprep.mubr.f32.mxu0 0.0
        %794 = vmatmul.mubr.f32.gmra.mrb[0].mxu0 %v616
        %v795 = vpop.f32.mrb[0].mxu0
        %v796 = vadd.f32 %v469, %v795
        %v797 = vpop.f32.mrb[0].mxu0
        %v798 = vadd.f32 %v469, %v797
        %799 = vmatprep.mubr.f32.mxu0 0.0
        %800 = vmatmul.mubr.f32.gmra.mrb[0].mxu0 %v619
        %v801 = vpop.f32.mrb[0].mxu0
        %v802 = vadd.f32 %v474, %v801
        %v803 = vpop.f32.mrb[0].mxu0
        %v804 = vadd.f32 %v474, %v803
        %805 = vmatprep.mubr.f32.mxu0 0.0
        %806 = vmatmul.mubr.f32.gmra.mrb[0].mxu0 %v622
        %v807 = vpop.f32.mrb[0].mxu0
        %v808 = vadd.f32 %v479, %v807
        %v809 = vpop.f32.mrb[0].mxu0
        %v810 = vadd.f32 %v479, %v809
        %811 = vmatprep.mubr.f32.mxu0 0.0
        %812 = vmatmul.mubr.f32.gmra.mrb[0].mxu0 %v625
        %v813 = vpop.f32.mrb[0].mxu0
        %v814 = vadd.f32 %v484, %v813
        %v815 = vpop.f32.mrb[0].mxu0
        %v816 = vadd.f32 %v484, %v815
        %817 = vmatprep.mubr.f32.mxu0 0.0
        %818 = vmatmul.mubr.f32.gmra.mrb[0].mxu0 %v628
        %v819 = vpop.f32.mrb[0].mxu0
        %v820 = vadd.f32 %v489, %v819
        %v821 = vpop.f32.mrb[0].mxu0
        %v822 = vadd.f32 %v489, %v821
        %823 = vmatprep.mubr.f32.mxu0 0.0
        %824 = vmatmul.mubr.f32.gmra.mrb[0].mxu0 %v631
        %v825 = vpop.f32.mrb[0].mxu0
        %v826 = vadd.f32 %v494, %v825
        %v827 = vpop.f32.mrb[0].mxu0
        %v828 = vadd.f32 %v494, %v827
        %829 = vmatprep.mubr.f32.mxu0 0.0
        %830 = vmatmul.mubr.f32.gmra.mrb[0].mxu0 %v634
        %v831 = vpop.f32.mrb[0].mxu0
        %v832 = vadd.f32 %v499, %v831
        %v833 = vpop.f32.mrb[0].mxu0
        %v834 = vadd.f32 %v499, %v833
        %835 = vmatprep.mubr.f32.mxu0 0.0
        %836 = vmatmul.mubr.f32.gmra.mrb[0].mxu0 %v637
        %v837 = vpop.f32.mrb[0].mxu0
        %v838 = vadd.f32 %v504, %v837
        %v839 = vpop.f32.mrb[0].mxu0
        %v840 = vadd.f32 %v504, %v839
        %841 = vmatprep.mubr.f32.mxu0 0.0
        %842 = vmatmul.mubr.f32.gmra.mrb[0].mxu0 %v640
        %v843 = vpop.f32.mrb[0].mxu0
        %v844 = vadd.f32 %v509, %v843
        %v845 = vpop.f32.mrb[0].mxu0
        %v846 = vadd.f32 %v509, %v845
        %847 = vmatprep.mubr.f32.mxu0 0.0
        %848 = vmatmul.mubr.f32.gmra.mrb[0].mxu0 %v643
        %v849 = vpop.f32.mrb[0].mxu0
        %v850 = vadd.f32 %v514, %v849
        %v851 = vpop.f32.mrb[0].mxu0
        %v852 = vadd.f32 %v514, %v851
        %853 = vmatprep.mubr.f32.mxu0 0.0
        %854 = vmatmul.mubr.f32.gmra.mrb[0].mxu0 %v646
        %v855 = vpop.f32.mrb[0].mxu0
        %v856 = vadd.f32 %v519, %v855
        %v857 = vpop.f32.mrb[0].mxu0
        %v858 = vadd.f32 %v519, %v857
        %859 = vmatprep.mubr.f32.mxu0 0.0
        %860 = vmatmul.mubr.f32.gmra.mrb[0].mxu0 %v649
        %v861 = vpop.f32.mrb[0].mxu0
        %v862 = vadd.f32 %v524, %v861
        %v863 = vpop.f32.mrb[0].mxu0
        %v864 = vadd.f32 %v524, %v863
        %865 = vmatprep.mubr.f32.mxu0 0.0
        %866 = vmatmul.mubr.f32.gmra.mrb[0].mxu0 %v652
        %v867 = vpop.f32.mrb[0].mxu0
        %v868 = vadd.f32 %v529, %v867
        %v869 = vpop.f32.mrb[0].mxu0
        %v870 = vadd.f32 %v529, %v869
        %871 = vmatprep.mubr.f32.mxu0 0.0
        %872 = vmatmul.mubr.f32.gmra.mrb[0].mxu0 %v655
        %v873 = vpop.f32.mrb[0].mxu0
        %v874 = vadd.f32 %v534, %v873
        %v875 = vpop.f32.mrb[0].mxu0
        %v876 = vadd.f32 %v534, %v875
        %877 = vmatprep.mubr.f32.mxu0 0.0
        %878 = vmatmul.mubr.f32.gmra.mrb[0].mxu0 %v658
        %v879 = vpop.f32.mrb[0].mxu0
        %v880 = vadd.f32 %v539, %v879
        %v881 = vpop.f32.mrb[0].mxu0
        %v882 = vadd.f32 %v539, %v881
        %883 = vmatprep.mubr.f32.mxu0 0.0
        %884 = vmatmul.mubr.f32.gmra.mrb[0].mxu0 %v661
        %v885 = vpop.f32.mrb[0].mxu0
        %v886 = vadd.f32 %v544, %v885
        %v887 = vpop.f32.mrb[0].mxu0
        %v888 = vadd.f32 %v544, %v887
        %889 = vmatprep.mubr.f32.mxu0 0.0
        %890 = vmatmul.mubr.f32.gmra.mrb[0].mxu0 %v664
        %v891 = vpop.f32.mrb[0].mxu0
        %v892 = vadd.f32 %v549, %v891
        %v893 = vpop.f32.mrb[0].mxu0
        %v894 = vadd.f32 %v549, %v893
        %895 = vmatprep.mubr.f32.mxu0 0.0
        %896 = vmatmul.mubr.f32.gmra.mrb[0].mxu0 %v667
        %v897 = vpop.f32.mrb[0].mxu0
        %v898 = vadd.f32 %v554, %v897
        %v899 = vpop.f32.mrb[0].mxu0
        %v900 = vadd.f32 %v554, %v899
        %901 = vmatprep.mubr.f32.mxu0 0.0
        %902 = vmatmul.mubr.f32.gmra.mrb[0].mxu0 %v670
        %v903 = vpop.f32.mrb[0].mxu0
        %v904 = vadd.f32 %v559, %v903
        %v905 = vpop.f32.mrb[0].mxu0
        %v906 = vadd.f32 %v559, %v905
        %907 = vmatprep.mubr.f32.mxu0 0.0
        %908 = vmatmul.mubr.f32.gmra.mrb[0].mxu0 %v673
        %v909 = vpop.f32.mrb[0].mxu0
        %v910 = vadd.f32 %v564, %v909
        %v911 = vpop.f32.mrb[0].mxu0
        %v912 = vadd.f32 %v564, %v911
        %913 = vmatprep.mubr.f32.mxu0 0.0
        %914 = vmatmul.mubr.f32.gmra.mrb[0].mxu0 %v676
        %v915 = vpop.f32.mrb[0].mxu0
        %v916 = vadd.f32 %v569, %v915
        %v917 = vpop.f32.mrb[0].mxu0
        %v918 = vadd.f32 %v569, %v917
        %919 = vmatprep.mubr.f32.mxu0 0.0
        %920 = vmatmul.mubr.f32.gmra.mrb[0].mxu0 %v679
        %v921 = vpop.f32.mrb[0].mxu0
        %v922 = vadd.f32 %v574, %v921
        %v923 = vpop.f32.mrb[0].mxu0
        %v924 = vadd.f32 %v574, %v923
        %925 = vmatprep.mubr.f32.mxu0 0.0
        %926 = vmatmul.mubr.f32.gmra.mrb[0].mxu0 %v682
        %v927 = vpop.f32.mrb[0].mxu0
        %v928 = vadd.f32 %v579, %v927
        %v929 = vpop.f32.mrb[0].mxu0
        %v930 = vadd.f32 %v579, %v929
        %931 = vmatprep.mubr.f32.mxu0 0.0
        %932 = vmatmul.mubr.f32.gmra.mrb[0].mxu0 %v685
        %v933 = vpop.f32.mrb[0].mxu0
        %v934 = vadd.f32 %v584, %v933
        %v935 = vpop.f32.mrb[0].mxu0
        %v936 = vadd.f32 %v584, %v935
        %937 = vmatprep.mubr.f32.mxu0 0.0
        %938 = vmatmul.mubr.f32.gmra.mrb[0].mxu0 %v688
        %v939 = vpop.f32.mrb[0].mxu0
        %v940 = vadd.f32 %v589, %v939
        %v941 = vpop.f32.mrb[0].mxu0
        %v942 = vadd.f32 %v589, %v941
        %943 = vmatprep.mubr.f32.mxu0 0.0
        %944 = vmatmul.mubr.f32.gmra.mrb[0].mxu0 %v691
        %v945 = vpop.f32.mrb[0].mxu0
        %v946 = vadd.f32 %v594, %v945
        %v947 = vpop.f32.mrb[0].mxu0
        %v948 = vadd.f32 %v594, %v947
        %949 = vdwg.mxu0
        %950 = vmatprep.subr.mxu0 %v365
        %951 = vmatpush1.msra.mxu0 %v364
        %952 = vmatprep.subr.mxu0 %v369
        %953 = vmatpush1.msra.mxu0 %v368
        %954 = vmatprep.subr.mxu0 0.0
        %955 = vmatpush1.msra.mxu0 0.0
        %956 = vmatprep.subr.mxu0 0.0
        %957 = vmatpush1.msra.mxu0 0.0
        %958 = vmatprep.subr.mxu0 0.0
        %959 = vmatpush1.msra.mxu0 0.0
        %960 = vmatprep.subr.mxu0 0.0
        %961 = vmatpush1.msra.mxu0 0.0
        %962 = vmatprep.subr.mxu0 0.0
        %963 = vmatpush1.msra.mxu0 0.0
        %964 = vmatprep.subr.mxu0 0.0
        %965 = vmatpush1.msra.mxu0 0.0
        %966 = vmatprep.subr.mxu0 0.0
        %967 = vmatpush1.msra.mxu0 0.0
        %968 = vmatprep.subr.mxu0 0.0
        %969 = vmatpush1.msra.mxu0 0.0
        %970 = vmatprep.subr.mxu0 0.0
        %971 = vmatpush1.msra.mxu0 0.0
        %972 = vmatprep.subr.mxu0 0.0
        %973 = vmatpush1.msra.mxu0 0.0
        %974 = vmatprep.subr.mxu0 0.0
        %975 = vmatpush1.msra.mxu0 0.0
        %976 = vmatprep.subr.mxu0 0.0
        %977 = vmatpush1.msra.mxu0 0.0
        %978 = vmatprep.subr.mxu0 0.0
        %979 = vmatpush1.msra.mxu0 0.0
        %980 = vmatprep.subr.mxu0 0.0
        %981 = vmatpush1.msra.mxu0 0.0
        %982 = vmatprep.subr.mxu0 0.0
        %983 = vmatpush1.msra.mxu0 0.0
        %984 = vmatprep.subr.mxu0 0.0
        %985 = vmatpush1.msra.mxu0 0.0
        %986 = vmatprep.subr.mxu0 0.0
        %987 = vmatpush1.msra.mxu0 0.0
        %988 = vmatprep.subr.mxu0 0.0
        %989 = vmatpush1.msra.mxu0 0.0
        %990 = vmatprep.subr.mxu0 0.0
        %991 = vmatpush1.msra.mxu0 0.0
        %992 = vmatprep.subr.mxu0 0.0
        %993 = vmatpush1.msra.mxu0 0.0
        %994 = vmatprep.subr.mxu0 0.0
        %995 = vmatpush1.msra.mxu0 0.0
        %996 = vmatprep.subr.mxu0 0.0
        %997 = vmatpush1.msra.mxu0 0.0
        %998 = vmatprep.subr.mxu0 0.0
        %999 = vmatpush1.msra.mxu0 0.0
        %1000 = vmatprep.subr.mxu0 0.0
        %1001 = vmatpush1.msra.mxu0 0.0
        %1002 = vmatprep.subr.mxu0 0.0
        %1003 = vmatpush1.msra.mxu0 0.0
        %1004 = vmatprep.subr.mxu0 0.0
        %1005 = vmatpush1.msra.mxu0 0.0
        %1006 = vmatprep.subr.mxu0 0.0
        %1007 = vmatpush1.msra.mxu0 0.0
        %1008 = vmatprep.subr.mxu0 0.0
        %1009 = vmatpush1.msra.mxu0 0.0
        %1010 = vmatprep.subr.mxu0 0.0
        %1011 = vmatpush1.msra.mxu0 0.0
        %1012 = vmatprep.subr.mxu0 0.0
        %1013 = vmatpush1.msra.mxu0 0.0
        %1014 = vmatprep.mubr.f32.mxu0 0.0
        %1015 = vmatmul.mubr.f32.gmra.mrb[0].mxu0 %v598
        %v1016 = vpop.f32.mrb[0].mxu0
        %v1017 = vadd.f32 %v439, %v1016
        %v1018 = vpop.f32.mrb[0].mxu0
        %v1019 = vadd.f32 %v439, %v1018
        %1020 = vmatprep.mubr.f32.mxu0 0.0
        %1021 = vmatmul.mubr.f32.gmra.mrb[0].mxu0 %v601
        %v1022 = vpop.f32.mrb[0].mxu0
        %v1023 = vadd.f32 %v444, %v1022
        %v1024 = vpop.f32.mrb[0].mxu0
        %v1025 = vadd.f32 %v444, %v1024
        %1026 = vmatprep.mubr.f32.mxu0 0.0
        %1027 = vmatmul.mubr.f32.gmra.mrb[0].mxu0 %v604
        %v1028 = vpop.f32.mrb[0].mxu0
        %v1029 = vadd.f32 %v449, %v1028
        %v1030 = vpop.f32.mrb[0].mxu0
        %v1031 = vadd.f32 %v449, %v1030
        %1032 = vmatprep.mubr.f32.mxu0 0.0
        %1033 = vmatmul.mubr.f32.gmra.mrb[0].mxu0 %v607
        %v1034 = vpop.f32.mrb[0].mxu0
        %v1035 = vadd.f32 %v454, %v1034
        %v1036 = vpop.f32.mrb[0].mxu0
        %v1037 = vadd.f32 %v454, %v1036
        %1038 = vmatprep.mubr.f32.mxu0 0.0
        %1039 = vmatmul.mubr.f32.gmra.mrb[0].mxu0 %v610
        %v1040 = vpop.f32.mrb[0].mxu0
        %v1041 = vadd.f32 %v459, %v1040
        %v1042 = vpop.f32.mrb[0].mxu0
        %v1043 = vadd.f32 %v459, %v1042
        %1044 = vmatprep.mubr.f32.mxu0 0.0
        %1045 = vmatmul.mubr.f32.gmra.mrb[0].mxu0 %v613
        %v1046 = vpop.f32.mrb[0].mxu0
        %v1047 = vadd.f32 %v464, %v1046
        %v1048 = vpop.f32.mrb[0].mxu0
        %v1049 = vadd.f32 %v464, %v1048
        %1050 = vmatprep.mubr.f32.mxu0 0.0
        %1051 = vmatmul.mubr.f32.gmra.mrb[0].mxu0 %v616
        %v1052 = vpop.f32.mrb[0].mxu0
        %v1053 = vadd.f32 %v469, %v1052
        %v1054 = vpop.f32.mrb[0].mxu0
        %v1055 = vadd.f32 %v469, %v1054
        %1056 = vmatprep.mubr.f32.mxu0 0.0
        %1057 = vmatmul.mubr.f32.gmra.mrb[0].mxu0 %v619
        %v1058 = vpop.f32.mrb[0].mxu0
        %v1059 = vadd.f32 %v474, %v1058
        %v1060 = vpop.f32.mrb[0].mxu0
        %v1061 = vadd.f32 %v474, %v1060
        %1062 = vmatprep.mubr.f32.mxu0 0.0
        %1063 = vmatmul.mubr.f32.gmra.mrb[0].mxu0 %v622
        %v1064 = vpop.f32.mrb[0].mxu0
        %v1065 = vadd.f32 %v479, %v1064
        %v1066 = vpop.f32.mrb[0].mxu0
        %v1067 = vadd.f32 %v479, %v1066
        %1068 = vmatprep.mubr.f32.mxu0 0.0
        %1069 = vmatmul.mubr.f32.gmra.mrb[0].mxu0 %v625
        %v1070 = vpop.f32.mrb[0].mxu0
        %v1071 = vadd.f32 %v484, %v1070
        %v1072 = vpop.f32.mrb[0].mxu0
        %v1073 = vadd.f32 %v484, %v1072
        %1074 = vmatprep.mubr.f32.mxu0 0.0
        %1075 = vmatmul.mubr.f32.gmra.mrb[0].mxu0 %v628
        %v1076 = vpop.f32.mrb[0].mxu0
        %v1077 = vadd.f32 %v489, %v1076
        %v1078 = vpop.f32.mrb[0].mxu0
        %v1079 = vadd.f32 %v489, %v1078
        %1080 = vmatprep.mubr.f32.mxu0 0.0
        %1081 = vmatmul.mubr.f32.gmra.mrb[0].mxu0 %v631
        %v1082 = vpop.f32.mrb[0].mxu0
        %v1083 = vadd.f32 %v494, %v1082
        %v1084 = vpop.f32.mrb[0].mxu0
        %v1085 = vadd.f32 %v494, %v1084
        %1086 = vmatprep.mubr.f32.mxu0 0.0
        %1087 = vmatmul.mubr.f32.gmra.mrb[0].mxu0 %v634
        %v1088 = vpop.f32.mrb[0].mxu0
        %v1089 = vadd.f32 %v499, %v1088
        %v1090 = vpop.f32.mrb[0].mxu0
        %v1091 = vadd.f32 %v499, %v1090
        %1092 = vmatprep.mubr.f32.mxu0 0.0
        %1093 = vmatmul.mubr.f32.gmra.mrb[0].mxu0 %v637
        %v1094 = vpop.f32.mrb[0].mxu0
        %v1095 = vadd.f32 %v504, %v1094
        %v1096 = vpop.f32.mrb[0].mxu0
        %v1097 = vadd.f32 %v504, %v1096
        %1098 = vmatprep.mubr.f32.mxu0 0.0
        %1099 = vmatmul.mubr.f32.gmra.mrb[0].mxu0 %v640
        %v1100 = vpop.f32.mrb[0].mxu0
        %v1101 = vadd.f32 %v509, %v1100
        %v1102 = vpop.f32.mrb[0].mxu0
        %v1103 = vadd.f32 %v509, %v1102
        %1104 = vmatprep.mubr.f32.mxu0 0.0
        %1105 = vmatmul.mubr.f32.gmra.mrb[0].mxu0 %v643
        %v1106 = vpop.f32.mrb[0].mxu0
        %v1107 = vadd.f32 %v514, %v1106
        %v1108 = vpop.f32.mrb[0].mxu0
        %v1109 = vadd.f32 %v514, %v1108
        %1110 = vmatprep.mubr.f32.mxu0 0.0
        %1111 = vmatmul.mubr.f32.gmra.mrb[0].mxu0 %v646
        %v1112 = vpop.f32.mrb[0].mxu0
        %v1113 = vadd.f32 %v519, %v1112
        %v1114 = vpop.f32.mrb[0].mxu0
        %v1115 = vadd.f32 %v519, %v1114
        %1116 = vmatprep.mubr.f32.mxu0 0.0
        %1117 = vmatmul.mubr.f32.gmra.mrb[0].mxu0 %v649
        %v1118 = vpop.f32.mrb[0].mxu0
        %v1119 = vadd.f32 %v524, %v1118
        %v1120 = vpop.f32.mrb[0].mxu0
        %v1121 = vadd.f32 %v524, %v1120
        %1122 = vmatprep.mubr.f32.mxu0 0.0
        %1123 = vmatmul.mubr.f32.gmra.mrb[0].mxu0 %v652
        %v1124 = vpop.f32.mrb[0].mxu0
        %v1125 = vadd.f32 %v529, %v1124
        %v1126 = vpop.f32.mrb[0].mxu0
        %v1127 = vadd.f32 %v529, %v1126
        %1128 = vmatprep.mubr.f32.mxu0 0.0
        %1129 = vmatmul.mubr.f32.gmra.mrb[0].mxu0 %v655
        %v1130 = vpop.f32.mrb[0].mxu0
        %v1131 = vadd.f32 %v534, %v1130
        %v1132 = vpop.f32.mrb[0].mxu0
        %v1133 = vadd.f32 %v534, %v1132
        %1134 = vmatprep.mubr.f32.mxu0 0.0
        %1135 = vmatmul.mubr.f32.gmra.mrb[0].mxu0 %v658
        %v1136 = vpop.f32.mrb[0].mxu0
        %v1137 = vadd.f32 %v539, %v1136
        %v1138 = vpop.f32.mrb[0].mxu0
        %v1139 = vadd.f32 %v539, %v1138
        %1140 = vmatprep.mubr.f32.mxu0 0.0
        %1141 = vmatmul.mubr.f32.gmra.mrb[0].mxu0 %v661
        %v1142 = vpop.f32.mrb[0].mxu0
        %v1143 = vadd.f32 %v544, %v1142
        %v1144 = vpop.f32.mrb[0].mxu0
        %v1145 = vadd.f32 %v544, %v1144
        %1146 = vmatprep.mubr.f32.mxu0 0.0
        %1147 = vmatmul.mubr.f32.gmra.mrb[0].mxu0 %v664
        %v1148 = vpop.f32.mrb[0].mxu0
        %v1149 = vadd.f32 %v549, %v1148
        %v1150 = vpop.f32.mrb[0].mxu0
        %v1151 = vadd.f32 %v549, %v1150
        %1152 = vmatprep.mubr.f32.mxu0 0.0
        %1153 = vmatmul.mubr.f32.gmra.mrb[0].mxu0 %v667
        %v1154 = vpop.f32.mrb[0].mxu0
        %v1155 = vadd.f32 %v554, %v1154
        %v1156 = vpop.f32.mrb[0].mxu0
        %v1157 = vadd.f32 %v554, %v1156
        %1158 = vmatprep.mubr.f32.mxu0 0.0
        %1159 = vmatmul.mubr.f32.gmra.mrb[0].mxu0 %v670
        %v1160 = vpop.f32.mrb[0].mxu0
        %v1161 = vadd.f32 %v559, %v1160
        %v1162 = vpop.f32.mrb[0].mxu0
        %v1163 = vadd.f32 %v559, %v1162
        %1164 = vmatprep.mubr.f32.mxu0 0.0
        %1165 = vmatmul.mubr.f32.gmra.mrb[0].mxu0 %v673
        %v1166 = vpop.f32.mrb[0].mxu0
        %v1167 = vadd.f32 %v564, %v1166
        %v1168 = vpop.f32.mrb[0].mxu0
        %v1169 = vadd.f32 %v564, %v1168
        %1170 = vmatprep.mubr.f32.mxu0 0.0
        %1171 = vmatmul.mubr.f32.gmra.mrb[0].mxu0 %v676
        %v1172 = vpop.f32.mrb[0].mxu0
        %v1173 = vadd.f32 %v569, %v1172
        %v1174 = vpop.f32.mrb[0].mxu0
        %v1175 = vadd.f32 %v569, %v1174
        %1176 = vmatprep.mubr.f32.mxu0 0.0
        %1177 = vmatmul.mubr.f32.gmra.mrb[0].mxu0 %v679
        %v1178 = vpop.f32.mrb[0].mxu0
        %v1179 = vadd.f32 %v574, %v1178
        %v1180 = vpop.f32.mrb[0].mxu0
        %v1181 = vadd.f32 %v574, %v1180
        %1182 = vmatprep.mubr.f32.mxu0 0.0
        %1183 = vmatmul.mubr.f32.gmra.mrb[0].mxu0 %v682
        %v1184 = vpop.f32.mrb[0].mxu0
        %v1185 = vadd.f32 %v579, %v1184
        %v1186 = vpop.f32.mrb[0].mxu0
        %v1187 = vadd.f32 %v579, %v1186
        %1188 = vmatprep.mubr.f32.mxu0 0.0
        %1189 = vmatmul.mubr.f32.gmra.mrb[0].mxu0 %v685
        %v1190 = vpop.f32.mrb[0].mxu0
        %v1191 = vadd.f32 %v584, %v1190
        %v1192 = vpop.f32.mrb[0].mxu0
        %v1193 = vadd.f32 %v584, %v1192
        %1194 = vmatprep.mubr.f32.mxu0 0.0
        %1195 = vmatmul.mubr.f32.gmra.mrb[0].mxu0 %v688
        %v1196 = vpop.f32.mrb[0].mxu0
        %v1197 = vadd.f32 %v589, %v1196
        %v1198 = vpop.f32.mrb[0].mxu0
        %v1199 = vadd.f32 %v589, %v1198
        %1200 = vmatprep.mubr.f32.mxu0 0.0
        %1201 = vmatmul.mubr.f32.gmra.mrb[0].mxu0 %v691
        %v1202 = vpop.f32.mrb[0].mxu0
        %v1203 = vadd.f32 %v594, %v1202
        %v1204 = vpop.f32.mrb[0].mxu0
        %v1205 = vadd.f32 %v594, %v1204
        %1206 = vdwg.mxu0
        %v1207 = vmax.f32 %v760, 0.0
        %v1208 = vmax.f32 %v762, 0.0
        %v1209 = vmax.f32 %v1017, 0.0
        %v1210 = vmax.f32 %v1019, 0.0
        %v1211 = vmax.f32 %v766, 0.0
        %v1212 = vmax.f32 %v768, 0.0
        %v1213 = vmax.f32 %v1023, 0.0
        %v1214 = vmax.f32 %v1025, 0.0
        %v1215 = vmax.f32 %v772, 0.0
        %v1216 = vmax.f32 %v774, 0.0
        %v1217 = vmax.f32 %v1029, 0.0
        %v1218 = vmax.f32 %v1031, 0.0
        %v1219 = vmax.f32 %v778, 0.0
        %v1220 = vmax.f32 %v780, 0.0
        %v1221 = vmax.f32 %v1035, 0.0
        %v1222 = vmax.f32 %v1037, 0.0
        %v1223 = vmax.f32 %v784, 0.0
        %v1224 = vmax.f32 %v786, 0.0
        %v1225 = vmax.f32 %v1041, 0.0
        %v1226 = vmax.f32 %v1043, 0.0
        %v1227 = vmax.f32 %v790, 0.0
        %v1228 = vmax.f32 %v792, 0.0
        %v1229 = vmax.f32 %v1047, 0.0
        %v1230 = vmax.f32 %v1049, 0.0
        %v1231 = vmax.f32 %v796, 0.0
        %v1232 = vmax.f32 %v798, 0.0
        %v1233 = vmax.f32 %v1053, 0.0
        %v1234 = vmax.f32 %v1055, 0.0
        %v1235 = vmax.f32 %v802, 0.0
        %v1236 = vmax.f32 %v804, 0.0
        %v1237 = vmax.f32 %v1059, 0.0
        %v1238 = vmax.f32 %v1061, 0.0
        %v1239 = vmax.f32 %v808, 0.0
        %v1240 = vmax.f32 %v810, 0.0
        %v1241 = vmax.f32 %v1065, 0.0
        %v1242 = vmax.f32 %v1067, 0.0
        %v1243 = vmax.f32 %v814, 0.0
        %v1244 = vmax.f32 %v816, 0.0
        %v1245 = vmax.f32 %v1071, 0.0
        %v1246 = vmax.f32 %v1073, 0.0
        %v1247 = vmax.f32 %v820, 0.0
        %v1248 = vmax.f32 %v822, 0.0
        %v1249 = vmax.f32 %v1077, 0.0
        %v1250 = vmax.f32 %v1079, 0.0
        %v1251 = vmax.f32 %v826, 0.0
        %v1252 = vmax.f32 %v828, 0.0
        %v1253 = vmax.f32 %v1083, 0.0
        %v1254 = vmax.f32 %v1085, 0.0
        %v1255 = vmax.f32 %v832, 0.0
        %v1256 = vmax.f32 %v834, 0.0
        %v1257 = vmax.f32 %v1089, 0.0
        %v1258 = vmax.f32 %v1091, 0.0
        %v1259 = vmax.f32 %v838, 0.0
        %v1260 = vmax.f32 %v840, 0.0
        %v1261 = vmax.f32 %v1095, 0.0
        %v1262 = vmax.f32 %v1097, 0.0
        %v1263 = vmax.f32 %v844, 0.0
        %v1264 = vmax.f32 %v846, 0.0
        %v1265 = vmax.f32 %v1101, 0.0
        %v1266 = vmax.f32 %v1103, 0.0
        %v1267 = vmax.f32 %v850, 0.0
        %v1268 = vmax.f32 %v852, 0.0
        %v1269 = vmax.f32 %v1107, 0.0
        %v1270 = vmax.f32 %v1109, 0.0
        %v1271 = vmax.f32 %v856, 0.0
        %v1272 = vmax.f32 %v858, 0.0
        %v1273 = vmax.f32 %v1113, 0.0
        %v1274 = vmax.f32 %v1115, 0.0
        %v1275 = vmax.f32 %v862, 0.0
        %v1276 = vmax.f32 %v864, 0.0
        %v1277 = vmax.f32 %v1119, 0.0
        %v1278 = vmax.f32 %v1121, 0.0
        %v1279 = vmax.f32 %v868, 0.0
        %v1280 = vmax.f32 %v870, 0.0
        %v1281 = vmax.f32 %v1125, 0.0
        %v1282 = vmax.f32 %v1127, 0.0
        %v1283 = vmax.f32 %v874, 0.0
        %v1284 = vmax.f32 %v876, 0.0
        %v1285 = vmax.f32 %v1131, 0.0
        %v1286 = vmax.f32 %v1133, 0.0
        %v1287 = vmax.f32 %v880, 0.0
        %v1288 = vmax.f32 %v882, 0.0
        %v1289 = vmax.f32 %v1137, 0.0
        %v1290 = vmax.f32 %v1139, 0.0
        %v1291 = vmax.f32 %v886, 0.0
        %v1292 = vmax.f32 %v888, 0.0
        %v1293 = vmax.f32 %v1143, 0.0
        %v1294 = vmax.f32 %v1145, 0.0
        %v1295 = vmax.f32 %v892, 0.0
        %v1296 = vmax.f32 %v894, 0.0
        %v1297 = vmax.f32 %v1149, 0.0
        %v1298 = vmax.f32 %v1151, 0.0
        %v1299 = vmax.f32 %v898, 0.0
        %v1300 = vmax.f32 %v900, 0.0
        %v1301 = vmax.f32 %v1155, 0.0
        %v1302 = vmax.f32 %v1157, 0.0
        %v1303 = vmax.f32 %v904, 0.0
        %v1304 = vmax.f32 %v906, 0.0
        %v1305 = vmax.f32 %v1161, 0.0
        %v1306 = vmax.f32 %v1163, 0.0
        %v1307 = vmax.f32 %v910, 0.0
        %v1308 = vmax.f32 %v912, 0.0
        %v1309 = vmax.f32 %v1167, 0.0
        %v1310 = vmax.f32 %v1169, 0.0
        %v1311 = vmax.f32 %v916, 0.0
        %v1312 = vmax.f32 %v918, 0.0
        %v1313 = vmax.f32 %v1173, 0.0
        %v1314 = vmax.f32 %v1175, 0.0
        %v1315 = vmax.f32 %v922, 0.0
        %v1316 = vmax.f32 %v924, 0.0
        %v1317 = vmax.f32 %v1179, 0.0
        %v1318 = vmax.f32 %v1181, 0.0
        %v1319 = vmax.f32 %v928, 0.0
        %v1320 = vmax.f32 %v930, 0.0
        %v1321 = vmax.f32 %v1185, 0.0
        %v1322 = vmax.f32 %v1187, 0.0
        %v1323 = vmax.f32 %v934, 0.0
        %v1324 = vmax.f32 %v936, 0.0
        %v1325 = vmax.f32 %v1191, 0.0
        %v1326 = vmax.f32 %v1193, 0.0
        %v1327 = vmax.f32 %v940, 0.0
        %v1328 = vmax.f32 %v942, 0.0
        %v1329 = vmax.f32 %v1197, 0.0
        %v1330 = vmax.f32 %v1199, 0.0
        %v1331 = vmax.f32 %v946, 0.0
        %v1332 = vmax.f32 %v948, 0.0
        %v1333 = vmax.f32 %v1203, 0.0
        %v1334 = vmax.f32 %v1205, 0.0
        %v1335 = vld [vmem:[%s4] sm:$0xff]
        %v1336 = vld [vmem:[%s4 + $0x8] sm:$0xff]
        %v1337 = vld [vmem:[%s4 + $0x10] sm:$0xff]
        %v1338 = vld [vmem:[%s4 + $0x18] sm:$0xff]
        %v1339 = vld [vmem:[%s4 + $0x20] sm:$0xff]
        %v1340 = vld [vmem:[%s4 + $0x28] sm:$0xff]
        %v1341 = vld [vmem:[%s4 + $0x30] sm:$0xff]
        %v1342 = vld [vmem:[%s4 + $0x38] sm:$0xff]
        %v1343 = vld [vmem:[%s4 + $0x40] sm:$0xff]
        %v1344 = vld [vmem:[%s4 + $0x48] sm:$0xff]
        %v1345 = vld [vmem:[%s4 + $0x50] sm:$0xff]
        %v1346 = vld [vmem:[%s4 + $0x58] sm:$0xff]
        %v1347 = vld [vmem:[%s4 + $0x60] sm:$0xff]
        %v1348 = vld [vmem:[%s4 + $0x68] sm:$0xff]
        %v1349 = vld [vmem:[%s4 + $0x70] sm:$0xff]
        %v1350 = vld [vmem:[%s4 + $0x78] sm:$0xff]
        %v1351 = vld [vmem:[%s5] sm:$0xff]
        %v1352 = vld [vmem:[%s5 + $0x8] sm:$0xff]
        %v1353 = vld [vmem:[%s5 + $0x10] sm:$0xff]
        %v1354 = vld [vmem:[%s5 + $0x18] sm:$0xff]
        %v1355 = vld [vmem:[%s5 + $0x20] sm:$0xff]
        %v1356 = vld [vmem:[%s5 + $0x28] sm:$0xff]
        %v1357 = vld [vmem:[%s5 + $0x30] sm:$0xff]
        %v1358 = vld [vmem:[%s5 + $0x38] sm:$0xff]
        %v1359 = vld [vmem:[%s5 + $0x40] sm:$0xff]
        %v1360 = vld [vmem:[%s5 + $0x48] sm:$0xff]
        %v1361 = vld [vmem:[%s5 + $0x50] sm:$0xff]
        %v1362 = vld [vmem:[%s5 + $0x58] sm:$0xff]
        %v1363 = vld [vmem:[%s5 + $0x60] sm:$0xff]
        %v1364 = vld [vmem:[%s5 + $0x68] sm:$0xff]
        %v1365 = vld [vmem:[%s5 + $0x70] sm:$0xff]
        %v1366 = vld [vmem:[%s5 + $0x78] sm:$0xff]
        %1368 = vset.pattern.permute.xlu0 0
        %1369 = vperm.xlu0 %1368, %v1351
        %v1370 = vpop.permute.xlu0 %1369
        %1373 = vset.pattern.permute.xlu0 0
        %1374 = vperm.xlu0 %1373, %v1352
        %v1375 = vpop.permute.xlu0 %1374
        %1378 = vset.pattern.permute.xlu0 0
        %1379 = vperm.xlu0 %1378, %v1353
        %v1380 = vpop.permute.xlu0 %1379
        %1383 = vset.pattern.permute.xlu0 0
        %1384 = vperm.xlu0 %1383, %v1354
        %v1385 = vpop.permute.xlu0 %1384
        %1388 = vset.pattern.permute.xlu0 0
        %1389 = vperm.xlu0 %1388, %v1355
        %v1390 = vpop.permute.xlu0 %1389
        %1393 = vset.pattern.permute.xlu0 0
        %1394 = vperm.xlu0 %1393, %v1356
        %v1395 = vpop.permute.xlu0 %1394
        %1398 = vset.pattern.permute.xlu0 0
        %1399 = vperm.xlu0 %1398, %v1357
        %v1400 = vpop.permute.xlu0 %1399
        %1403 = vset.pattern.permute.xlu0 0
        %1404 = vperm.xlu0 %1403, %v1358
        %v1405 = vpop.permute.xlu0 %1404
        %1408 = vset.pattern.permute.xlu0 0
        %1409 = vperm.xlu0 %1408, %v1359
        %v1410 = vpop.permute.xlu0 %1409
        %1413 = vset.pattern.permute.xlu0 0
        %1414 = vperm.xlu0 %1413, %v1360
        %v1415 = vpop.permute.xlu0 %1414
        %1418 = vset.pattern.permute.xlu0 0
        %1419 = vperm.xlu0 %1418, %v1361
        %v1420 = vpop.permute.xlu0 %1419
        %1423 = vset.pattern.permute.xlu0 0
        %1424 = vperm.xlu0 %1423, %v1362
        %v1425 = vpop.permute.xlu0 %1424
        %1428 = vset.pattern.permute.xlu0 0
        %1429 = vperm.xlu0 %1428, %v1363
        %v1430 = vpop.permute.xlu0 %1429
        %1433 = vset.pattern.permute.xlu0 0
        %1434 = vperm.xlu0 %1433, %v1364
        %v1435 = vpop.permute.xlu0 %1434
        %1438 = vset.pattern.permute.xlu0 0
        %1439 = vperm.xlu0 %1438, %v1365
        %v1440 = vpop.permute.xlu0 %1439
        %1443 = vset.pattern.permute.xlu0 0
        %1444 = vperm.xlu0 %1443, %v1366
        %v1445 = vpop.permute.xlu0 %1444
        %1447 = vmatprep.subr.mxu0 %v1208
        %1448 = vmatpush1.msra.mxu0 %v1207
        %1449 = vmatprep.subr.mxu0 %v1212
        %1450 = vmatpush1.msra.mxu0 %v1211
        %1451 = vmatprep.subr.mxu0 %v1216
        %1452 = vmatpush1.msra.mxu0 %v1215
        %1453 = vmatprep.subr.mxu0 %v1220
        %1454 = vmatpush1.msra.mxu0 %v1219
        %1455 = vmatprep.subr.mxu0 %v1224
        %1456 = vmatpush1.msra.mxu0 %v1223
        %1457 = vmatprep.subr.mxu0 %v1228
        %1458 = vmatpush1.msra.mxu0 %v1227
        %1459 = vmatprep.subr.mxu0 %v1232
        %1460 = vmatpush1.msra.mxu0 %v1231
        %1461 = vmatprep.subr.mxu0 %v1236
        %1462 = vmatpush1.msra.mxu0 %v1235
        %1463 = vmatprep.subr.mxu0 %v1240
        %1464 = vmatpush1.msra.mxu0 %v1239
        %1465 = vmatprep.subr.mxu0 %v1244
        %1466 = vmatpush1.msra.mxu0 %v1243
        %1467 = vmatprep.subr.mxu0 %v1248
        %1468 = vmatpush1.msra.mxu0 %v1247
        %1469 = vmatprep.subr.mxu0 %v1252
        %1470 = vmatpush1.msra.mxu0 %v1251
        %1471 = vmatprep.subr.mxu0 %v1256
        %1472 = vmatpush1.msra.mxu0 %v1255
        %1473 = vmatprep.subr.mxu0 %v1260
        %1474 = vmatpush1.msra.mxu0 %v1259
        %1475 = vmatprep.subr.mxu0 %v1264
        %1476 = vmatpush1.msra.mxu0 %v1263
        %1477 = vmatprep.subr.mxu0 %v1268
        %1478 = vmatpush1.msra.mxu0 %v1267
        %1479 = vmatprep.subr.mxu0 0.0
        %1480 = vmatpush1.msra.mxu0 0.0
        %1481 = vmatprep.subr.mxu0 0.0
        %1482 = vmatpush1.msra.mxu0 0.0
        %1483 = vmatprep.subr.mxu0 0.0
        %1484 = vmatpush1.msra.mxu0 0.0
        %1485 = vmatprep.subr.mxu0 0.0
        %1486 = vmatpush1.msra.mxu0 0.0
        %1487 = vmatprep.subr.mxu0 0.0
        %1488 = vmatpush1.msra.mxu0 0.0
        %1489 = vmatprep.subr.mxu0 0.0
        %1490 = vmatpush1.msra.mxu0 0.0
        %1491 = vmatprep.subr.mxu0 0.0
        %1492 = vmatpush1.msra.mxu0 0.0
        %1493 = vmatprep.subr.mxu0 0.0
        %1494 = vmatpush1.msra.mxu0 0.0
        %1495 = vmatprep.subr.mxu0 0.0
        %1496 = vmatpush1.msra.mxu0 0.0
        %1497 = vmatprep.subr.mxu0 0.0
        %1498 = vmatpush1.msra.mxu0 0.0
        %1499 = vmatprep.subr.mxu0 0.0
        %1500 = vmatpush1.msra.mxu0 0.0
        %1501 = vmatprep.subr.mxu0 0.0
        %1502 = vmatpush1.msra.mxu0 0.0
        %1503 = vmatprep.subr.mxu0 0.0
        %1504 = vmatpush1.msra.mxu0 0.0
        %1505 = vmatprep.subr.mxu0 0.0
        %1506 = vmatpush1.msra.mxu0 0.0
        %1507 = vmatprep.subr.mxu0 0.0
        %1508 = vmatpush1.msra.mxu0 0.0
        %1509 = vmatprep.subr.mxu0 0.0
        %1510 = vmatpush1.msra.mxu0 0.0
        %1511 = vmatprep.mubr.f32.mxu0 0.0
        %1512 = vmatmul.mubr.f32.gmra.mrb[0].mxu0 %v1335
        %v1513 = vpop.f32.mrb[0].mxu0
        %v1514 = vadd.f32 %v1370, %v1513
        %v1515 = vpop.f32.mrb[0].mxu0
        %v1516 = vadd.f32 %v1370, %v1515
        %1517 = vmatprep.mubr.f32.mxu0 0.0
        %1518 = vmatmul.mubr.f32.gmra.mrb[0].mxu0 %v1336
        %v1519 = vpop.f32.mrb[0].mxu0
        %v1520 = vadd.f32 %v1375, %v1519
        %v1521 = vpop.f32.mrb[0].mxu0
        %v1522 = vadd.f32 %v1375, %v1521
        %1523 = vmatprep.mubr.f32.mxu0 0.0
        %1524 = vmatmul.mubr.f32.gmra.mrb[0].mxu0 %v1337
        %v1525 = vpop.f32.mrb[0].mxu0
        %v1526 = vadd.f32 %v1380, %v1525
        %v1527 = vpop.f32.mrb[0].mxu0
        %v1528 = vadd.f32 %v1380, %v1527
        %1529 = vmatprep.mubr.f32.mxu0 0.0
        %1530 = vmatmul.mubr.f32.gmra.mrb[0].mxu0 %v1338
        %v1531 = vpop.f32.mrb[0].mxu0
        %v1532 = vadd.f32 %v1385, %v1531
        %v1533 = vpop.f32.mrb[0].mxu0
        %v1534 = vadd.f32 %v1385, %v1533
        %1535 = vmatprep.mubr.f32.mxu0 0.0
        %1536 = vmatmul.mubr.f32.gmra.mrb[0].mxu0 %v1339
        %v1537 = vpop.f32.mrb[0].mxu0
        %v1538 = vadd.f32 %v1390, %v1537
        %v1539 = vpop.f32.mrb[0].mxu0
        %v1540 = vadd.f32 %v1390, %v1539
        %1541 = vmatprep.mubr.f32.mxu0 0.0
        %1542 = vmatmul.mubr.f32.gmra.mrb[0].mxu0 %v1340
        %v1543 = vpop.f32.mrb[0].mxu0
        %v1544 = vadd.f32 %v1395, %v1543
        %v1545 = vpop.f32.mrb[0].mxu0
        %v1546 = vadd.f32 %v1395, %v1545
        %1547 = vmatprep.mubr.f32.mxu0 0.0
        %1548 = vmatmul.mubr.f32.gmra.mrb[0].mxu0 %v1341
        %v1549 = vpop.f32.mrb[0].mxu0
        %v1550 = vadd.f32 %v1400, %v1549
        %v1551 = vpop.f32.mrb[0].mxu0
        %v1552 = vadd.f32 %v1400, %v1551
        %1553 = vmatprep.mubr.f32.mxu0 0.0
        %1554 = vmatmul.mubr.f32.gmra.mrb[0].mxu0 %v1342
        %v1555 = vpop.f32.mrb[0].mxu0
        %v1556 = vadd.f32 %v1405, %v1555
        %v1557 = vpop.f32.mrb[0].mxu0
        %v1558 = vadd.f32 %v1405, %v1557
        %1559 = vmatprep.mubr.f32.mxu0 0.0
        %1560 = vmatmul.mubr.f32.gmra.mrb[0].mxu0 %v1343
        %v1561 = vpop.f32.mrb[0].mxu0
        %v1562 = vadd.f32 %v1410, %v1561
        %v1563 = vpop.f32.mrb[0].mxu0
        %v1564 = vadd.f32 %v1410, %v1563
        %1565 = vmatprep.mubr.f32.mxu0 0.0
        %1566 = vmatmul.mubr.f32.gmra.mrb[0].mxu0 %v1344
        %v1567 = vpop.f32.mrb[0].mxu0
        %v1568 = vadd.f32 %v1415, %v1567
        %v1569 = vpop.f32.mrb[0].mxu0
        %v1570 = vadd.f32 %v1415, %v1569
        %1571 = vmatprep.mubr.f32.mxu0 0.0
        %1572 = vmatmul.mubr.f32.gmra.mrb[0].mxu0 %v1345
        %v1573 = vpop.f32.mrb[0].mxu0
        %v1574 = vadd.f32 %v1420, %v1573
        %v1575 = vpop.f32.mrb[0].mxu0
        %v1576 = vadd.f32 %v1420, %v1575
        %1577 = vmatprep.mubr.f32.mxu0 0.0
        %1578 = vmatmul.mubr.f32.gmra.mrb[0].mxu0 %v1346
        %v1579 = vpop.f32.mrb[0].mxu0
        %v1580 = vadd.f32 %v1425, %v1579
        %v1581 = vpop.f32.mrb[0].mxu0
        %v1582 = vadd.f32 %v1425, %v1581
        %1583 = vmatprep.mubr.f32.mxu0 0.0
        %1584 = vmatmul.mubr.f32.gmra.mrb[0].mxu0 %v1347
        %v1585 = vpop.f32.mrb[0].mxu0
        %v1586 = vadd.f32 %v1430, %v1585
        %v1587 = vpop.f32.mrb[0].mxu0
        %v1588 = vadd.f32 %v1430, %v1587
        %1589 = vmatprep.mubr.f32.mxu0 0.0
        %1590 = vmatmul.mubr.f32.gmra.mrb[0].mxu0 %v1348
        %v1591 = vpop.f32.mrb[0].mxu0
        %v1592 = vadd.f32 %v1435, %v1591
        %v1593 = vpop.f32.mrb[0].mxu0
        %v1594 = vadd.f32 %v1435, %v1593
        %1595 = vmatprep.mubr.f32.mxu0 0.0
        %1596 = vmatmul.mubr.f32.gmra.mrb[0].mxu0 %v1349
        %v1597 = vpop.f32.mrb[0].mxu0
        %v1598 = vadd.f32 %v1440, %v1597
        %v1599 = vpop.f32.mrb[0].mxu0
        %v1600 = vadd.f32 %v1440, %v1599
        %1601 = vmatprep.mubr.f32.mxu0 0.0
        %1602 = vmatmul.mubr.f32.gmra.mrb[0].mxu0 %v1350
        %v1603 = vpop.f32.mrb[0].mxu0
        %v1604 = vadd.f32 %v1445, %v1603
        %v1605 = vpop.f32.mrb[0].mxu0
        %v1606 = vadd.f32 %v1445, %v1605
        %1607 = vdwg.mxu0
        %1608 = vmatprep.subr.mxu0 %v1210
        %1609 = vmatpush1.msra.mxu0 %v1209
        %1610 = vmatprep.subr.mxu0 %v1214
        %1611 = vmatpush1.msra.mxu0 %v1213
        %1612 = vmatprep.subr.mxu0 %v1218
        %1613 = vmatpush1.msra.mxu0 %v1217
        %1614 = vmatprep.subr.mxu0 %v1222
        %1615 = vmatpush1.msra.mxu0 %v1221
        %1616 = vmatprep.subr.mxu0 %v1226
        %1617 = vmatpush1.msra.mxu0 %v1225
        %1618 = vmatprep.subr.mxu0 %v1230
        %1619 = vmatpush1.msra.mxu0 %v1229
        %1620 = vmatprep.subr.mxu0 %v1234
        %1621 = vmatpush1.msra.mxu0 %v1233
        %1622 = vmatprep.subr.mxu0 %v1238
        %1623 = vmatpush1.msra.mxu0 %v1237
        %1624 = vmatprep.subr.mxu0 %v1242
        %1625 = vmatpush1.msra.mxu0 %v1241
        %1626 = vmatprep.subr.mxu0 %v1246
        %1627 = vmatpush1.msra.mxu0 %v1245
        %1628 = vmatprep.subr.mxu0 %v1250
        %1629 = vmatpush1.msra.mxu0 %v1249
        %1630 = vmatprep.subr.mxu0 %v1254
        %1631 = vmatpush1.msra.mxu0 %v1253
        %1632 = vmatprep.subr.mxu0 %v1258
        %1633 = vmatpush1.msra.mxu0 %v1257
        %1634 = vmatprep.subr.mxu0 %v1262
        %1635 = vmatpush1.msra.mxu0 %v1261
        %1636 = vmatprep.subr.mxu0 %v1266
        %1637 = vmatpush1.msra.mxu0 %v1265
        %1638 = vmatprep.subr.mxu0 %v1270
        %1639 = vmatpush1.msra.mxu0 %v1269
        %1640 = vmatprep.subr.mxu0 0.0
        %1641 = vmatpush1.msra.mxu0 0.0
        %1642 = vmatprep.subr.mxu0 0.0
        %1643 = vmatpush1.msra.mxu0 0.0
        %1644 = vmatprep.subr.mxu0 0.0
        %1645 = vmatpush1.msra.mxu0 0.0
        %1646 = vmatprep.subr.mxu0 0.0
        %1647 = vmatpush1.msra.mxu0 0.0
        %1648 = vmatprep.subr.mxu0 0.0
        %1649 = vmatpush1.msra.mxu0 0.0
        %1650 = vmatprep.subr.mxu0 0.0
        %1651 = vmatpush1.msra.mxu0 0.0
        %1652 = vmatprep.subr.mxu0 0.0
        %1653 = vmatpush1.msra.mxu0 0.0
        %1654 = vmatprep.subr.mxu0 0.0
        %1655 = vmatpush1.msra.mxu0 0.0
        %1656 = vmatprep.subr.mxu0 0.0
        %1657 = vmatpush1.msra.mxu0 0.0
        %1658 = vmatprep.subr.mxu0 0.0
        %1659 = vmatpush1.msra.mxu0 0.0
        %1660 = vmatprep.subr.mxu0 0.0
        %1661 = vmatpush1.msra.mxu0 0.0
        %1662 = vmatprep.subr.mxu0 0.0
        %1663 = vmatpush1.msra.mxu0 0.0
        %1664 = vmatprep.subr.mxu0 0.0
        %1665 = vmatpush1.msra.mxu0 0.0
        %1666 = vmatprep.subr.mxu0 0.0
        %1667 = vmatpush1.msra.mxu0 0.0
        %1668 = vmatprep.subr.mxu0 0.0
        %1669 = vmatpush1.msra.mxu0 0.0
        %1670 = vmatprep.subr.mxu0 0.0
        %1671 = vmatpush1.msra.mxu0 0.0
        %1672 = vmatprep.mubr.f32.mxu0 0.0
        %1673 = vmatmul.mubr.f32.gmra.mrb[0].mxu0 %v1335
        %v1674 = vpop.f32.mrb[0].mxu0
        %v1675 = vadd.f32 %v1370, %v1674
        %v1676 = vpop.f32.mrb[0].mxu0
        %v1677 = vadd.f32 %v1370, %v1676
        %1678 = vmatprep.mubr.f32.mxu0 0.0
        %1679 = vmatmul.mubr.f32.gmra.mrb[0].mxu0 %v1336
        %v1680 = vpop.f32.mrb[0].mxu0
        %v1681 = vadd.f32 %v1375, %v1680
        %v1682 = vpop.f32.mrb[0].mxu0
        %v1683 = vadd.f32 %v1375, %v1682
        %1684 = vmatprep.mubr.f32.mxu0 0.0
        %1685 = vmatmul.mubr.f32.gmra.mrb[0].mxu0 %v1337
        %v1686 = vpop.f32.mrb[0].mxu0
        %v1687 = vadd.f32 %v1380, %v1686
        %v1688 = vpop.f32.mrb[0].mxu0
        %v1689 = vadd.f32 %v1380, %v1688
        %1690 = vmatprep.mubr.f32.mxu0 0.0
        %1691 = vmatmul.mubr.f32.gmra.mrb[0].mxu0 %v1338
        %v1692 = vpop.f32.mrb[0].mxu0
        %v1693 = vadd.f32 %v1385, %v1692
        %v1694 = vpop.f32.mrb[0].mxu0
        %v1695 = vadd.f32 %v1385, %v1694
        %1696 = vmatprep.mubr.f32.mxu0 0.0
        %1697 = vmatmul.mubr.f32.gmra.mrb[0].mxu0 %v1339
        %v1698 = vpop.f32.mrb[0].mxu0
        %v1699 = vadd.f32 %v1390, %v1698
        %v1700 = vpop.f32.mrb[0].mxu0
        %v1701 = vadd.f32 %v1390, %v1700
        %1702 = vmatprep.mubr.f32.mxu0 0.0
        %1703 = vmatmul.mubr.f32.gmra.mrb[0].mxu0 %v1340
        %v1704 = vpop.f32.mrb[0].mxu0
        %v1705 = vadd.f32 %v1395, %v1704
        %v1706 = vpop.f32.mrb[0].mxu0
        %v1707 = vadd.f32 %v1395, %v1706
        %1708 = vmatprep.mubr.f32.mxu0 0.0
        %1709 = vmatmul.mubr.f32.gmra.mrb[0].mxu0 %v1341
        %v1710 = vpop.f32.mrb[0].mxu0
        %v1711 = vadd.f32 %v1400, %v1710
        %v1712 = vpop.f32.mrb[0].mxu0
        %v1713 = vadd.f32 %v1400, %v1712
        %1714 = vmatprep.mubr.f32.mxu0 0.0
        %1715 = vmatmul.mubr.f32.gmra.mrb[0].mxu0 %v1342
        %v1716 = vpop.f32.mrb[0].mxu0
        %v1717 = vadd.f32 %v1405, %v1716
        %v1718 = vpop.f32.mrb[0].mxu0
        %v1719 = vadd.f32 %v1405, %v1718
        %1720 = vmatprep.mubr.f32.mxu0 0.0
        %1721 = vmatmul.mubr.f32.gmra.mrb[0].mxu0 %v1343
        %v1722 = vpop.f32.mrb[0].mxu0
        %v1723 = vadd.f32 %v1410, %v1722
        %v1724 = vpop.f32.mrb[0].mxu0
        %v1725 = vadd.f32 %v1410, %v1724
        %1726 = vmatprep.mubr.f32.mxu0 0.0
        %1727 = vmatmul.mubr.f32.gmra.mrb[0].mxu0 %v1344
        %v1728 = vpop.f32.mrb[0].mxu0
        %v1729 = vadd.f32 %v1415, %v1728
        %v1730 = vpop.f32.mrb[0].mxu0
        %v1731 = vadd.f32 %v1415, %v1730
        %1732 = vmatprep.mubr.f32.mxu0 0.0
        %1733 = vmatmul.mubr.f32.gmra.mrb[0].mxu0 %v1345
        %v1734 = vpop.f32.mrb[0].mxu0
        %v1735 = vadd.f32 %v1420, %v1734
        %v1736 = vpop.f32.mrb[0].mxu0
        %v1737 = vadd.f32 %v1420, %v1736
        %1738 = vmatprep.mubr.f32.mxu0 0.0
        %1739 = vmatmul.mubr.f32.gmra.mrb[0].mxu0 %v1346
        %v1740 = vpop.f32.mrb[0].mxu0
        %v1741 = vadd.f32 %v1425, %v1740
        %v1742 = vpop.f32.mrb[0].mxu0
        %v1743 = vadd.f32 %v1425, %v1742
        %1744 = vmatprep.mubr.f32.mxu0 0.0
        %1745 = vmatmul.mubr.f32.gmra.mrb[0].mxu0 %v1347
        %v1746 = vpop.f32.mrb[0].mxu0
        %v1747 = vadd.f32 %v1430, %v1746
        %v1748 = vpop.f32.mrb[0].mxu0
        %v1749 = vadd.f32 %v1430, %v1748
        %1750 = vmatprep.mubr.f32.mxu0 0.0
        %1751 = vmatmul.mubr.f32.gmra.mrb[0].mxu0 %v1348
        %v1752 = vpop.f32.mrb[0].mxu0
        %v1753 = vadd.f32 %v1435, %v1752
        %v1754 = vpop.f32.mrb[0].mxu0
        %v1755 = vadd.f32 %v1435, %v1754
        %1756 = vmatprep.mubr.f32.mxu0 0.0
        %1757 = vmatmul.mubr.f32.gmra.mrb[0].mxu0 %v1349
        %v1758 = vpop.f32.mrb[0].mxu0
        %v1759 = vadd.f32 %v1440, %v1758
        %v1760 = vpop.f32.mrb[0].mxu0
        %v1761 = vadd.f32 %v1440, %v1760
        %1762 = vmatprep.mubr.f32.mxu0 0.0
        %1763 = vmatmul.mubr.f32.gmra.mrb[0].mxu0 %v1350
        %v1764 = vpop.f32.mrb[0].mxu0
        %v1765 = vadd.f32 %v1445, %v1764
        %v1766 = vpop.f32.mrb[0].mxu0
        %v1767 = vadd.f32 %v1445, %v1766
        %1768 = vdwg.mxu0
        %v1769 = vmax.f32 %v1514, 0.0
        %v1770 = vmax.f32 %v1516, 0.0
        %v1771 = vmax.f32 %v1675, 0.0
        %v1772 = vmax.f32 %v1677, 0.0
        %v1773 = vmax.f32 %v1520, 0.0
        %v1774 = vmax.f32 %v1522, 0.0
        %v1775 = vmax.f32 %v1681, 0.0
        %v1776 = vmax.f32 %v1683, 0.0
        %v1777 = vmax.f32 %v1526, 0.0
        %v1778 = vmax.f32 %v1528, 0.0
        %v1779 = vmax.f32 %v1687, 0.0
        %v1780 = vmax.f32 %v1689, 0.0
        %v1781 = vmax.f32 %v1532, 0.0
        %v1782 = vmax.f32 %v1534, 0.0
        %v1783 = vmax.f32 %v1693, 0.0
        %v1784 = vmax.f32 %v1695, 0.0
        %v1785 = vmax.f32 %v1538, 0.0
        %v1786 = vmax.f32 %v1540, 0.0
        %v1787 = vmax.f32 %v1699, 0.0
        %v1788 = vmax.f32 %v1701, 0.0
        %v1789 = vmax.f32 %v1544, 0.0
        %v1790 = vmax.f32 %v1546, 0.0
        %v1791 = vmax.f32 %v1705, 0.0
        %v1792 = vmax.f32 %v1707, 0.0
        %v1793 = vmax.f32 %v1550, 0.0
        %v1794 = vmax.f32 %v1552, 0.0
        %v1795 = vmax.f32 %v1711, 0.0
        %v1796 = vmax.f32 %v1713, 0.0
        %v1797 = vmax.f32 %v1556, 0.0
        %v1798 = vmax.f32 %v1558, 0.0
        %v1799 = vmax.f32 %v1717, 0.0
        %v1800 = vmax.f32 %v1719, 0.0
        %v1801 = vmax.f32 %v1562, 0.0
        %v1802 = vmax.f32 %v1564, 0.0
        %v1803 = vmax.f32 %v1723, 0.0
        %v1804 = vmax.f32 %v1725, 0.0
        %v1805 = vmax.f32 %v1568, 0.0
        %v1806 = vmax.f32 %v1570, 0.0
        %v1807 = vmax.f32 %v1729, 0.0
        %v1808 = vmax.f32 %v1731, 0.0
        %v1809 = vmax.f32 %v1574, 0.0
        %v1810 = vmax.f32 %v1576, 0.0
        %v1811 = vmax.f32 %v1735, 0.0
        %v1812 = vmax.f32 %v1737, 0.0
        %v1813 = vmax.f32 %v1580, 0.0
        %v1814 = vmax.f32 %v1582, 0.0
        %v1815 = vmax.f32 %v1741, 0.0
        %v1816 = vmax.f32 %v1743, 0.0
        %v1817 = vmax.f32 %v1586, 0.0
        %v1818 = vmax.f32 %v1588, 0.0
        %v1819 = vmax.f32 %v1747, 0.0
        %v1820 = vmax.f32 %v1749, 0.0
        %v1821 = vmax.f32 %v1592, 0.0
        %v1822 = vmax.f32 %v1594, 0.0
        %v1823 = vmax.f32 %v1753, 0.0
        %v1824 = vmax.f32 %v1755, 0.0
        %v1825 = vmax.f32 %v1598, 0.0
        %v1826 = vmax.f32 %v1600, 0.0
        %v1827 = vmax.f32 %v1759, 0.0
        %v1828 = vmax.f32 %v1761, 0.0
        %v1829 = vmax.f32 %v1604, 0.0
        %v1830 = vmax.f32 %v1606, 0.0
        %v1831 = vmax.f32 %v1765, 0.0
        %v1832 = vmax.f32 %v1767, 0.0
        %v1833 = vld [vmem:[%s6] sm:$0xff]
        %v1834 = vld [vmem:[%s6 + $0x8] sm:$0xff]
        %v1835 = vld [vmem:[%s6 + $0x10] sm:$0xff]
        %v1836 = vld [vmem:[%s6 + $0x18] sm:$0xff]
        %v1837 = vld [vmem:[%s6 + $0x20] sm:$0xff]
        %v1838 = vld [vmem:[%s6 + $0x28] sm:$0xff]
        %v1839 = vld [vmem:[%s6 + $0x30] sm:$0xff]
        %v1840 = vld [vmem:[%s6 + $0x38] sm:$0xff]
        %v1841 = vld [vmem:[%s6 + $0x40] sm:$0xff]
        %v1842 = vld [vmem:[%s6 + $0x48] sm:$0xff]
        %v1843 = vld [vmem:[%s6 + $0x50] sm:$0xff]
        %v1844 = vld [vmem:[%s6 + $0x58] sm:$0xff]
        %v1845 = vld [vmem:[%s6 + $0x60] sm:$0xff]
        %v1846 = vld [vmem:[%s6 + $0x68] sm:$0xff]
        %v1847 = vld [vmem:[%s6 + $0x70] sm:$0xff]
        %v1848 = vld [vmem:[%s6 + $0x78] sm:$0xff]
        %v1849 = vld [vmem:[%s6 + $0x80] sm:$0xff]
        %v1850 = vld [vmem:[%s6 + $0x88] sm:$0xff]
        %v1851 = vld [vmem:[%s6 + $0x90] sm:$0xff]
        %v1852 = vld [vmem:[%s6 + $0x98] sm:$0xff]
        %v1853 = vld [vmem:[%s6 + $0xa0] sm:$0xff]
        %v1854 = vld [vmem:[%s6 + $0xa8] sm:$0xff]
        %v1855 = vld [vmem:[%s6 + $0xb0] sm:$0xff]
        %v1856 = vld [vmem:[%s6 + $0xb8] sm:$0xff]
        %v1857 = vld [vmem:[%s6 + $0xc0] sm:$0xff]
        %v1858 = vld [vmem:[%s6 + $0xc8] sm:$0xff]
        %v1859 = vld [vmem:[%s6 + $0xd0] sm:$0xff]
        %v1860 = vld [vmem:[%s6 + $0xd8] sm:$0xff]
        %v1861 = vld [vmem:[%s6 + $0xe0] sm:$0xff]
        %v1862 = vld [vmem:[%s6 + $0xe8] sm:$0xff]
        %v1863 = vld [vmem:[%s6 + $0xf0] sm:$0xff]
        %v1864 = vld [vmem:[%s6 + $0xf8] sm:$0xff]
        %v1865 = vld [vmem:[%s6 + $0x100] sm:$0xff]
        %v1866 = vld [vmem:[%s6 + $0x108] sm:$0xff]
        %v1867 = vld [vmem:[%s6 + $0x110] sm:$0xff]
        %v1868 = vld [vmem:[%s6 + $0x118] sm:$0xff]
        %v1869 = vld [vmem:[%s6 + $0x120] sm:$0xff]
        %v1870 = vld [vmem:[%s6 + $0x128] sm:$0xff]
        %v1871 = vld [vmem:[%s6 + $0x130] sm:$0xff]
        %v1872 = vld [vmem:[%s6 + $0x138] sm:$0xff]
        %v1873 = vld [vmem:[%s6 + $0x140] sm:$0xff]
        %v1874 = vld [vmem:[%s6 + $0x148] sm:$0xff]
        %v1875 = vld [vmem:[%s6 + $0x150] sm:$0xff]
        %v1876 = vld [vmem:[%s6 + $0x158] sm:$0xff]
        %v1877 = vld [vmem:[%s6 + $0x160] sm:$0xff]
        %v1878 = vld [vmem:[%s6 + $0x168] sm:$0xff]
        %v1879 = vld [vmem:[%s6 + $0x170] sm:$0xff]
        %v1880 = vld [vmem:[%s6 + $0x178] sm:$0xff]
        %v1881 = vld [vmem:[%s6 + $0x180] sm:$0xff]
        %v1882 = vld [vmem:[%s6 + $0x188] sm:$0xff]
        %v1883 = vld [vmem:[%s7] sm:$0xff]
        %v1884 = vld [vmem:[%s7 + $0x8] sm:$0xff]
        %v1885 = vld [vmem:[%s7 + $0x10] sm:$0xff]
        %v1886 = vld [vmem:[%s7 + $0x18] sm:$0xff]
        %v1887 = vld [vmem:[%s7 + $0x20] sm:$0xff]
        %v1888 = vld [vmem:[%s7 + $0x28] sm:$0xff]
        %v1889 = vld [vmem:[%s7 + $0x30] sm:$0xff]
        %v1890 = vld [vmem:[%s7 + $0x38] sm:$0xff]
        %v1891 = vld [vmem:[%s7 + $0x40] sm:$0xff]
        %v1892 = vld [vmem:[%s7 + $0x48] sm:$0xff]
        %v1893 = vld [vmem:[%s7 + $0x50] sm:$0xff]
        %v1894 = vld [vmem:[%s7 + $0x58] sm:$0xff]
        %v1895 = vld [vmem:[%s7 + $0x60] sm:$0xff]
        %v1896 = vld [vmem:[%s7 + $0x68] sm:$0xff]
        %v1897 = vld [vmem:[%s7 + $0x70] sm:$0xff]
        %v1898 = vld [vmem:[%s7 + $0x78] sm:$0xff]
        %v1899 = vld [vmem:[%s7 + $0x80] sm:$0xff]
        %v1900 = vld [vmem:[%s7 + $0x88] sm:$0xff]
        %v1901 = vld [vmem:[%s7 + $0x90] sm:$0xff]
        %v1902 = vld [vmem:[%s7 + $0x98] sm:$0xff]
        %v1903 = vld [vmem:[%s7 + $0xa0] sm:$0xff]
        %v1904 = vld [vmem:[%s7 + $0xa8] sm:$0xff]
        %v1905 = vld [vmem:[%s7 + $0xb0] sm:$0xff]
        %v1906 = vld [vmem:[%s7 + $0xb8] sm:$0xff]
        %v1907 = vld [vmem:[%s7 + $0xc0] sm:$0xff]
        %1909 = vset.pattern.permute.xlu0 0
        %1910 = vperm.xlu0 %1909, %v1883
        %v1911 = vpop.permute.xlu0 %1910
        %1914 = vset.pattern.permute.xlu0 0
        %1915 = vperm.xlu0 %1914, %v1884
        %v1916 = vpop.permute.xlu0 %1915
        %1919 = vset.pattern.permute.xlu0 0
        %1920 = vperm.xlu0 %1919, %v1885
        %v1921 = vpop.permute.xlu0 %1920
        %1924 = vset.pattern.permute.xlu0 0
        %1925 = vperm.xlu0 %1924, %v1886
        %v1926 = vpop.permute.xlu0 %1925
        %1929 = vset.pattern.permute.xlu0 0
        %1930 = vperm.xlu0 %1929, %v1887
        %v1931 = vpop.permute.xlu0 %1930
        %1934 = vset.pattern.permute.xlu0 0
        %1935 = vperm.xlu0 %1934, %v1888
        %v1936 = vpop.permute.xlu0 %1935
        %1939 = vset.pattern.permute.xlu0 0
        %1940 = vperm.xlu0 %1939, %v1889
        %v1941 = vpop.permute.xlu0 %1940
        %1944 = vset.pattern.permute.xlu0 0
        %1945 = vperm.xlu0 %1944, %v1890
        %v1946 = vpop.permute.xlu0 %1945
        %1949 = vset.pattern.permute.xlu0 0
        %1950 = vperm.xlu0 %1949, %v1891
        %v1951 = vpop.permute.xlu0 %1950
        %1954 = vset.pattern.permute.xlu0 0
        %1955 = vperm.xlu0 %1954, %v1892
        %v1956 = vpop.permute.xlu0 %1955
        %1959 = vset.pattern.permute.xlu0 0
        %1960 = vperm.xlu0 %1959, %v1893
        %v1961 = vpop.permute.xlu0 %1960
        %1964 = vset.pattern.permute.xlu0 0
        %1965 = vperm.xlu0 %1964, %v1894
        %v1966 = vpop.permute.xlu0 %1965
        %1969 = vset.pattern.permute.xlu0 0
        %1970 = vperm.xlu0 %1969, %v1895
        %v1971 = vpop.permute.xlu0 %1970
        %1974 = vset.pattern.permute.xlu0 0
        %1975 = vperm.xlu0 %1974, %v1896
        %v1976 = vpop.permute.xlu0 %1975
        %1979 = vset.pattern.permute.xlu0 0
        %1980 = vperm.xlu0 %1979, %v1897
        %v1981 = vpop.permute.xlu0 %1980
        %1984 = vset.pattern.permute.xlu0 0
        %1985 = vperm.xlu0 %1984, %v1898
        %v1986 = vpop.permute.xlu0 %1985
        %1989 = vset.pattern.permute.xlu0 0
        %1990 = vperm.xlu0 %1989, %v1899
        %v1991 = vpop.permute.xlu0 %1990
        %1994 = vset.pattern.permute.xlu0 0
        %1995 = vperm.xlu0 %1994, %v1900
        %v1996 = vpop.permute.xlu0 %1995
        %1999 = vset.pattern.permute.xlu0 0
        %2000 = vperm.xlu0 %1999, %v1901
        %v2001 = vpop.permute.xlu0 %2000
        %2004 = vset.pattern.permute.xlu0 0
        %2005 = vperm.xlu0 %2004, %v1902
        %v2006 = vpop.permute.xlu0 %2005
        %2009 = vset.pattern.permute.xlu0 0
        %2010 = vperm.xlu0 %2009, %v1903
        %v2011 = vpop.permute.xlu0 %2010
        %2014 = vset.pattern.permute.xlu0 0
        %2015 = vperm.xlu0 %2014, %v1904
        %v2016 = vpop.permute.xlu0 %2015
        %2019 = vset.pattern.permute.xlu0 0
        %2020 = vperm.xlu0 %2019, %v1905
        %v2021 = vpop.permute.xlu0 %2020
        %2024 = vset.pattern.permute.xlu0 0
        %2025 = vperm.xlu0 %2024, %v1906
        %v2026 = vpop.permute.xlu0 %2025
        %2029 = vset.pattern.permute.xlu0 0
        %2030 = vperm.xlu0 %2029, %v1907
        %v2031 = vpop.permute.xlu0 %2030
        %2033 = vmatprep.subr.mxu0 %v1770
        %2034 = vmatpush1.msra.mxu0 %v1769
        %2035 = vmatprep.subr.mxu0 %v1774
        %2036 = vmatpush1.msra.mxu0 %v1773
        %2037 = vmatprep.subr.mxu0 %v1778
        %2038 = vmatpush1.msra.mxu0 %v1777
        %2039 = vmatprep.subr.mxu0 %v1782
        %2040 = vmatpush1.msra.mxu0 %v1781
        %2041 = vmatprep.subr.mxu0 %v1786
        %2042 = vmatpush1.msra.mxu0 %v1785
        %2043 = vmatprep.subr.mxu0 %v1790
        %2044 = vmatpush1.msra.mxu0 %v1789
        %2045 = vmatprep.subr.mxu0 %v1794
        %2046 = vmatpush1.msra.mxu0 %v1793
        %2047 = vmatprep.subr.mxu0 %v1798
        %2048 = vmatpush1.msra.mxu0 %v1797
        %2049 = vmatprep.subr.mxu0 %v1802
        %2050 = vmatpush1.msra.mxu0 %v1801
        %2051 = vmatprep.subr.mxu0 %v1806
        %2052 = vmatpush1.msra.mxu0 %v1805
        %2053 = vmatprep.subr.mxu0 %v1810
        %2054 = vmatpush1.msra.mxu0 %v1809
        %2055 = vmatprep.subr.mxu0 %v1814
        %2056 = vmatpush1.msra.mxu0 %v1813
        %2057 = vmatprep.subr.mxu0 %v1818
        %2058 = vmatpush1.msra.mxu0 %v1817
        %2059 = vmatprep.subr.mxu0 %v1822
        %2060 = vmatpush1.msra.mxu0 %v1821
        %2061 = vmatprep.subr.mxu0 %v1826
        %2062 = vmatpush1.msra.mxu0 %v1825
        %2063 = vmatprep.subr.mxu0 %v1830
        %2064 = vmatpush1.msra.mxu0 %v1829
        %2065 = vmatprep.subr.mxu0 %v1272
        %2066 = vmatpush1.msra.mxu0 %v1271
        %2067 = vmatprep.subr.mxu0 %v1276
        %2068 = vmatpush1.msra.mxu0 %v1275
        %2069 = vmatprep.subr.mxu0 %v1280
        %2070 = vmatpush1.msra.mxu0 %v1279
        %2071 = vmatprep.subr.mxu0 %v1284
        %2072 = vmatpush1.msra.mxu0 %v1283
        %2073 = vmatprep.subr.mxu0 %v1288
        %2074 = vmatpush1.msra.mxu0 %v1287
        %2075 = vmatprep.subr.mxu0 %v1292
        %2076 = vmatpush1.msra.mxu0 %v1291
        %2077 = vmatprep.subr.mxu0 %v1296
        %2078 = vmatpush1.msra.mxu0 %v1295
        %2079 = vmatprep.subr.mxu0 %v1300
        %2080 = vmatpush1.msra.mxu0 %v1299
        %2081 = vmatprep.subr.mxu0 %v1304
        %2082 = vmatpush1.msra.mxu0 %v1303
        %2083 = vmatprep.subr.mxu0 %v1308
        %2084 = vmatpush1.msra.mxu0 %v1307
        %2085 = vmatprep.subr.mxu0 %v1312
        %2086 = vmatpush1.msra.mxu0 %v1311
        %2087 = vmatprep.subr.mxu0 %v1316
        %2088 = vmatpush1.msra.mxu0 %v1315
        %2089 = vmatprep.subr.mxu0 %v1320
        %2090 = vmatpush1.msra.mxu0 %v1319
        %2091 = vmatprep.subr.mxu0 %v1324
        %2092 = vmatpush1.msra.mxu0 %v1323
        %2093 = vmatprep.subr.mxu0 %v1328
        %2094 = vmatpush1.msra.mxu0 %v1327
        %2095 = vmatprep.subr.mxu0 %v1332
        %2096 = vmatpush1.msra.mxu0 %v1331
        %2097 = vmatprep.mubr.f32.mxu0 %v1834
        %2098 = vmatmul.mubr.f32.gmra.mrb[0].mxu0 %v1833
        %v2099 = vpop.f32.mrb[0].mxu0
        %v2100 = vadd.f32 %v1911, %v2099
        %v2101 = vpop.f32.mrb[0].mxu0
        %v2102 = vadd.f32 %v1911, %v2101
        %2103 = vmatprep.mubr.f32.mxu0 %v1836
        %2104 = vmatmul.mubr.f32.gmra.mrb[0].mxu0 %v1835
        %v2105 = vpop.f32.mrb[0].mxu0
        %v2106 = vadd.f32 %v1916, %v2105
        %v2107 = vpop.f32.mrb[0].mxu0
        %v2108 = vadd.f32 %v1916, %v2107
        %2109 = vmatprep.mubr.f32.mxu0 %v1838
        %2110 = vmatmul.mubr.f32.gmra.mrb[0].mxu0 %v1837
        %v2111 = vpop.f32.mrb[0].mxu0
        %v2112 = vadd.f32 %v1921, %v2111
        %v2113 = vpop.f32.mrb[0].mxu0
        %v2114 = vadd.f32 %v1921, %v2113
        %2115 = vmatprep.mubr.f32.mxu0 %v1840
        %2116 = vmatmul.mubr.f32.gmra.mrb[0].mxu0 %v1839
        %v2117 = vpop.f32.mrb[0].mxu0
        %v2118 = vadd.f32 %v1926, %v2117
        %v2119 = vpop.f32.mrb[0].mxu0
        %v2120 = vadd.f32 %v1926, %v2119
        %2121 = vmatprep.mubr.f32.mxu0 %v1842
        %2122 = vmatmul.mubr.f32.gmra.mrb[0].mxu0 %v1841
        %v2123 = vpop.f32.mrb[0].mxu0
        %v2124 = vadd.f32 %v1931, %v2123
        %v2125 = vpop.f32.mrb[0].mxu0
        %v2126 = vadd.f32 %v1931, %v2125
        %2127 = vmatprep.mubr.f32.mxu0 %v1844
        %2128 = vmatmul.mubr.f32.gmra.mrb[0].mxu0 %v1843
        %v2129 = vpop.f32.mrb[0].mxu0
        %v2130 = vadd.f32 %v1936, %v2129
        %v2131 = vpop.f32.mrb[0].mxu0
        %v2132 = vadd.f32 %v1936, %v2131
        %2133 = vmatprep.mubr.f32.mxu0 %v1846
        %2134 = vmatmul.mubr.f32.gmra.mrb[0].mxu0 %v1845
        %v2135 = vpop.f32.mrb[0].mxu0
        %v2136 = vadd.f32 %v1941, %v2135
        %v2137 = vpop.f32.mrb[0].mxu0
        %v2138 = vadd.f32 %v1941, %v2137
        %2139 = vmatprep.mubr.f32.mxu0 %v1848
        %2140 = vmatmul.mubr.f32.gmra.mrb[0].mxu0 %v1847
        %v2141 = vpop.f32.mrb[0].mxu0
        %v2142 = vadd.f32 %v1946, %v2141
        %v2143 = vpop.f32.mrb[0].mxu0
        %v2144 = vadd.f32 %v1946, %v2143
        %2145 = vmatprep.mubr.f32.mxu0 %v1850
        %2146 = vmatmul.mubr.f32.gmra.mrb[0].mxu0 %v1849
        %v2147 = vpop.f32.mrb[0].mxu0
        %v2148 = vadd.f32 %v1951, %v2147
        %v2149 = vpop.f32.mrb[0].mxu0
        %v2150 = vadd.f32 %v1951, %v2149
        %2151 = vmatprep.mubr.f32.mxu0 %v1852
        %2152 = vmatmul.mubr.f32.gmra.mrb[0].mxu0 %v1851
        %v2153 = vpop.f32.mrb[0].mxu0
        %v2154 = vadd.f32 %v1956, %v2153
        %v2155 = vpop.f32.mrb[0].mxu0
        %v2156 = vadd.f32 %v1956, %v2155
        %2157 = vmatprep.mubr.f32.mxu0 %v1854
        %2158 = vmatmul.mubr.f32.gmra.mrb[0].mxu0 %v1853
        %v2159 = vpop.f32.mrb[0].mxu0
        %v2160 = vadd.f32 %v1961, %v2159
        %v2161 = vpop.f32.mrb[0].mxu0
        %v2162 = vadd.f32 %v1961, %v2161
        %2163 = vmatprep.mubr.f32.mxu0 %v1856
        %2164 = vmatmul.mubr.f32.gmra.mrb[0].mxu0 %v1855
        %v2165 = vpop.f32.mrb[0].mxu0
        %v2166 = vadd.f32 %v1966, %v2165
        %v2167 = vpop.f32.mrb[0].mxu0
        %v2168 = vadd.f32 %v1966, %v2167
        %2169 = vmatprep.mubr.f32.mxu0 %v1858
        %2170 = vmatmul.mubr.f32.gmra.mrb[0].mxu0 %v1857
        %v2171 = vpop.f32.mrb[0].mxu0
        %v2172 = vadd.f32 %v1971, %v2171
        %v2173 = vpop.f32.mrb[0].mxu0
        %v2174 = vadd.f32 %v1971, %v2173
        %2175 = vmatprep.mubr.f32.mxu0 %v1860
        %2176 = vmatmul.mubr.f32.gmra.mrb[0].mxu0 %v1859
        %v2177 = vpop.f32.mrb[0].mxu0
        %v2178 = vadd.f32 %v1976, %v2177
        %v2179 = vpop.f32.mrb[0].mxu0
        %v2180 = vadd.f32 %v1976, %v2179
        %2181 = vmatprep.mubr.f32.mxu0 %v1862
        %2182 = vmatmul.mubr.f32.gmra.mrb[0].mxu0 %v1861
        %v2183 = vpop.f32.mrb[0].mxu0
        %v2184 = vadd.f32 %v1981, %v2183
        %v2185 = vpop.f32.mrb[0].mxu0
        %v2186 = vadd.f32 %v1981, %v2185
        %2187 = vmatprep.mubr.f32.mxu0 %v1864
        %2188 = vmatmul.mubr.f32.gmra.mrb[0].mxu0 %v1863
        %v2189 = vpop.f32.mrb[0].mxu0
        %v2190 = vadd.f32 %v1986, %v2189
        %v2191 = vpop.f32.mrb[0].mxu0
        %v2192 = vadd.f32 %v1986, %v2191
        %2193 = vmatprep.mubr.f32.mxu0 %v1866
        %2194 = vmatmul.mubr.f32.gmra.mrb[0].mxu0 %v1865
        %v2195 = vpop.f32.mrb[0].mxu0
        %v2196 = vadd.f32 %v1991, %v2195
        %v2197 = vpop.f32.mrb[0].mxu0
        %v2198 = vadd.f32 %v1991, %v2197
        %2199 = vmatprep.mubr.f32.mxu0 %v1868
        %2200 = vmatmul.mubr.f32.gmra.mrb[0].mxu0 %v1867
        %v2201 = vpop.f32.mrb[0].mxu0
        %v2202 = vadd.f32 %v1996, %v2201
        %v2203 = vpop.f32.mrb[0].mxu0
        %v2204 = vadd.f32 %v1996, %v2203
        %2205 = vmatprep.mubr.f32.mxu0 %v1870
        %2206 = vmatmul.mubr.f32.gmra.mrb[0].mxu0 %v1869
        %v2207 = vpop.f32.mrb[0].mxu0
        %v2208 = vadd.f32 %v2001, %v2207
        %v2209 = vpop.f32.mrb[0].mxu0
        %v2210 = vadd.f32 %v2001, %v2209
        %2211 = vmatprep.mubr.f32.mxu0 %v1872
        %2212 = vmatmul.mubr.f32.gmra.mrb[0].mxu0 %v1871
        %v2213 = vpop.f32.mrb[0].mxu0
        %v2214 = vadd.f32 %v2006, %v2213
        %v2215 = vpop.f32.mrb[0].mxu0
        %v2216 = vadd.f32 %v2006, %v2215
        %2217 = vmatprep.mubr.f32.mxu0 %v1874
        %2218 = vmatmul.mubr.f32.gmra.mrb[0].mxu0 %v1873
        %v2219 = vpop.f32.mrb[0].mxu0
        %v2220 = vadd.f32 %v2011, %v2219
        %v2221 = vpop.f32.mrb[0].mxu0
        %v2222 = vadd.f32 %v2011, %v2221
        %2223 = vmatprep.mubr.f32.mxu0 %v1876
        %2224 = vmatmul.mubr.f32.gmra.mrb[0].mxu0 %v1875
        %v2225 = vpop.f32.mrb[0].mxu0
        %v2226 = vadd.f32 %v2016, %v2225
        %v2227 = vpop.f32.mrb[0].mxu0
        %v2228 = vadd.f32 %v2016, %v2227
        %2229 = vmatprep.mubr.f32.mxu0 %v1878
        %2230 = vmatmul.mubr.f32.gmra.mrb[0].mxu0 %v1877
        %v2231 = vpop.f32.mrb[0].mxu0
        %v2232 = vadd.f32 %v2021, %v2231
        %v2233 = vpop.f32.mrb[0].mxu0
        %v2234 = vadd.f32 %v2021, %v2233
        %2235 = vmatprep.mubr.f32.mxu0 %v1880
        %2236 = vmatmul.mubr.f32.gmra.mrb[0].mxu0 %v1879
        %v2237 = vpop.f32.mrb[0].mxu0
        %v2238 = vadd.f32 %v2026, %v2237
        %v2239 = vpop.f32.mrb[0].mxu0
        %v2240 = vadd.f32 %v2026, %v2239
        %2241 = vmatprep.mubr.f32.mxu0 %v1882
        %2242 = vmatmul.mubr.f32.gmra.mrb[0].mxu0 %v1881
        %v2243 = vpop.f32.mrb[0].mxu0
        %v2244 = vadd.f32 %v2031, %v2243
        %v2245 = vpop.f32.mrb[0].mxu0
        %v2246 = vadd.f32 %v2031, %v2245
        %2247 = vdwg.mxu0
        %2248 = vmatprep.subr.mxu0 %v1772
        %2249 = vmatpush1.msra.mxu0 %v1771
        %2250 = vmatprep.subr.mxu0 %v1776
        %2251 = vmatpush1.msra.mxu0 %v1775
        %2252 = vmatprep.subr.mxu0 %v1780
        %2253 = vmatpush1.msra.mxu0 %v1779
        %2254 = vmatprep.subr.mxu0 %v1784
        %2255 = vmatpush1.msra.mxu0 %v1783
        %2256 = vmatprep.subr.mxu0 %v1788
        %2257 = vmatpush1.msra.mxu0 %v1787
        %2258 = vmatprep.subr.mxu0 %v1792
        %2259 = vmatpush1.msra.mxu0 %v1791
        %2260 = vmatprep.subr.mxu0 %v1796
        %2261 = vmatpush1.msra.mxu0 %v1795
        %2262 = vmatprep.subr.mxu0 %v1800
        %2263 = vmatpush1.msra.mxu0 %v1799
        %2264 = vmatprep.subr.mxu0 %v1804
        %2265 = vmatpush1.msra.mxu0 %v1803
        %2266 = vmatprep.subr.mxu0 %v1808
        %2267 = vmatpush1.msra.mxu0 %v1807
        %2268 = vmatprep.subr.mxu0 %v1812
        %2269 = vmatpush1.msra.mxu0 %v1811
        %2270 = vmatprep.subr.mxu0 %v1816
        %2271 = vmatpush1.msra.mxu0 %v1815
        %2272 = vmatprep.subr.mxu0 %v1820
        %2273 = vmatpush1.msra.mxu0 %v1819
        %2274 = vmatprep.subr.mxu0 %v1824
        %2275 = vmatpush1.msra.mxu0 %v1823
        %2276 = vmatprep.subr.mxu0 %v1828
        %2277 = vmatpush1.msra.mxu0 %v1827
        %2278 = vmatprep.subr.mxu0 %v1832
        %2279 = vmatpush1.msra.mxu0 %v1831
        %2280 = vmatprep.subr.mxu0 %v1274
        %2281 = vmatpush1.msra.mxu0 %v1273
        %2282 = vmatprep.subr.mxu0 %v1278
        %2283 = vmatpush1.msra.mxu0 %v1277
        %2284 = vmatprep.subr.mxu0 %v1282
        %2285 = vmatpush1.msra.mxu0 %v1281
        %2286 = vmatprep.subr.mxu0 %v1286
        %2287 = vmatpush1.msra.mxu0 %v1285
        %2288 = vmatprep.subr.mxu0 %v1290
        %2289 = vmatpush1.msra.mxu0 %v1289
        %2290 = vmatprep.subr.mxu0 %v1294
        %2291 = vmatpush1.msra.mxu0 %v1293
        %2292 = vmatprep.subr.mxu0 %v1298
        %2293 = vmatpush1.msra.mxu0 %v1297
        %2294 = vmatprep.subr.mxu0 %v1302
        %2295 = vmatpush1.msra.mxu0 %v1301
        %2296 = vmatprep.subr.mxu0 %v1306
        %2297 = vmatpush1.msra.mxu0 %v1305
        %2298 = vmatprep.subr.mxu0 %v1310
        %2299 = vmatpush1.msra.mxu0 %v1309
        %2300 = vmatprep.subr.mxu0 %v1314
        %2301 = vmatpush1.msra.mxu0 %v1313
        %2302 = vmatprep.subr.mxu0 %v1318
        %2303 = vmatpush1.msra.mxu0 %v1317
        %2304 = vmatprep.subr.mxu0 %v1322
        %2305 = vmatpush1.msra.mxu0 %v1321
        %2306 = vmatprep.subr.mxu0 %v1326
        %2307 = vmatpush1.msra.mxu0 %v1325
        %2308 = vmatprep.subr.mxu0 %v1330
        %2309 = vmatpush1.msra.mxu0 %v1329
        %2310 = vmatprep.subr.mxu0 %v1334
        %2311 = vmatpush1.msra.mxu0 %v1333
        %2312 = vmatprep.mubr.f32.mxu0 %v1834
        %2313 = vmatmul.mubr.f32.gmra.mrb[0].mxu0 %v1833
        %v2314 = vpop.f32.mrb[0].mxu0
        %v2315 = vadd.f32 %v1911, %v2314
        %v2316 = vpop.f32.mrb[0].mxu0
        %v2317 = vadd.f32 %v1911, %v2316
        %2318 = vmatprep.mubr.f32.mxu0 %v1836
        %2319 = vmatmul.mubr.f32.gmra.mrb[0].mxu0 %v1835
        %v2320 = vpop.f32.mrb[0].mxu0
        %v2321 = vadd.f32 %v1916, %v2320
        %v2322 = vpop.f32.mrb[0].mxu0
        %v2323 = vadd.f32 %v1916, %v2322
        %2324 = vmatprep.mubr.f32.mxu0 %v1838
        %2325 = vmatmul.mubr.f32.gmra.mrb[0].mxu0 %v1837
        %v2326 = vpop.f32.mrb[0].mxu0
        %v2327 = vadd.f32 %v1921, %v2326
        %v2328 = vpop.f32.mrb[0].mxu0
        %v2329 = vadd.f32 %v1921, %v2328
        %2330 = vmatprep.mubr.f32.mxu0 %v1840
        %2331 = vmatmul.mubr.f32.gmra.mrb[0].mxu0 %v1839
        %v2332 = vpop.f32.mrb[0].mxu0
        %v2333 = vadd.f32 %v1926, %v2332
        %v2334 = vpop.f32.mrb[0].mxu0
        %v2335 = vadd.f32 %v1926, %v2334
        %2336 = vmatprep.mubr.f32.mxu0 %v1842
        %2337 = vmatmul.mubr.f32.gmra.mrb[0].mxu0 %v1841
        %v2338 = vpop.f32.mrb[0].mxu0
        %v2339 = vadd.f32 %v1931, %v2338
        %v2340 = vpop.f32.mrb[0].mxu0
        %v2341 = vadd.f32 %v1931, %v2340
        %2342 = vmatprep.mubr.f32.mxu0 %v1844
        %2343 = vmatmul.mubr.f32.gmra.mrb[0].mxu0 %v1843
        %v2344 = vpop.f32.mrb[0].mxu0
        %v2345 = vadd.f32 %v1936, %v2344
        %v2346 = vpop.f32.mrb[0].mxu0
        %v2347 = vadd.f32 %v1936, %v2346
        %2348 = vmatprep.mubr.f32.mxu0 %v1846
        %2349 = vmatmul.mubr.f32.gmra.mrb[0].mxu0 %v1845
        %v2350 = vpop.f32.mrb[0].mxu0
        %v2351 = vadd.f32 %v1941, %v2350
        %v2352 = vpop.f32.mrb[0].mxu0
        %v2353 = vadd.f32 %v1941, %v2352
        %2354 = vmatprep.mubr.f32.mxu0 %v1848
        %2355 = vmatmul.mubr.f32.gmra.mrb[0].mxu0 %v1847
        %v2356 = vpop.f32.mrb[0].mxu0
        %v2357 = vadd.f32 %v1946, %v2356
        %v2358 = vpop.f32.mrb[0].mxu0
        %v2359 = vadd.f32 %v1946, %v2358
        %2360 = vmatprep.mubr.f32.mxu0 %v1850
        %2361 = vmatmul.mubr.f32.gmra.mrb[0].mxu0 %v1849
        %v2362 = vpop.f32.mrb[0].mxu0
        %v2363 = vadd.f32 %v1951, %v2362
        %v2364 = vpop.f32.mrb[0].mxu0
        %v2365 = vadd.f32 %v1951, %v2364
        %2366 = vmatprep.mubr.f32.mxu0 %v1852
        %2367 = vmatmul.mubr.f32.gmra.mrb[0].mxu0 %v1851
        %v2368 = vpop.f32.mrb[0].mxu0
        %v2369 = vadd.f32 %v1956, %v2368
        %v2370 = vpop.f32.mrb[0].mxu0
        %v2371 = vadd.f32 %v1956, %v2370
        %2372 = vmatprep.mubr.f32.mxu0 %v1854
        %2373 = vmatmul.mubr.f32.gmra.mrb[0].mxu0 %v1853
        %v2374 = vpop.f32.mrb[0].mxu0
        %v2375 = vadd.f32 %v1961, %v2374
        %v2376 = vpop.f32.mrb[0].mxu0
        %v2377 = vadd.f32 %v1961, %v2376
        %2378 = vmatprep.mubr.f32.mxu0 %v1856
        %2379 = vmatmul.mubr.f32.gmra.mrb[0].mxu0 %v1855
        %v2380 = vpop.f32.mrb[0].mxu0
        %v2381 = vadd.f32 %v1966, %v2380
        %v2382 = vpop.f32.mrb[0].mxu0
        %v2383 = vadd.f32 %v1966, %v2382
        %2384 = vmatprep.mubr.f32.mxu0 %v1858
        %2385 = vmatmul.mubr.f32.gmra.mrb[0].mxu0 %v1857
        %v2386 = vpop.f32.mrb[0].mxu0
        %v2387 = vadd.f32 %v1971, %v2386
        %v2388 = vpop.f32.mrb[0].mxu0
        %v2389 = vadd.f32 %v1971, %v2388
        %2390 = vmatprep.mubr.f32.mxu0 %v1860
        %2391 = vmatmul.mubr.f32.gmra.mrb[0].mxu0 %v1859
        %v2392 = vpop.f32.mrb[0].mxu0
        %v2393 = vadd.f32 %v1976, %v2392
        %v2394 = vpop.f32.mrb[0].mxu0
        %v2395 = vadd.f32 %v1976, %v2394
        %2396 = vmatprep.mubr.f32.mxu0 %v1862
        %2397 = vmatmul.mubr.f32.gmra.mrb[0].mxu0 %v1861
        %v2398 = vpop.f32.mrb[0].mxu0
        %v2399 = vadd.f32 %v1981, %v2398
        %v2400 = vpop.f32.mrb[0].mxu0
        %v2401 = vadd.f32 %v1981, %v2400
        %2402 = vmatprep.mubr.f32.mxu0 %v1864
        %2403 = vmatmul.mubr.f32.gmra.mrb[0].mxu0 %v1863
        %v2404 = vpop.f32.mrb[0].mxu0
        %v2405 = vadd.f32 %v1986, %v2404
        %v2406 = vpop.f32.mrb[0].mxu0
        %v2407 = vadd.f32 %v1986, %v2406
        %2408 = vmatprep.mubr.f32.mxu0 %v1866
        %2409 = vmatmul.mubr.f32.gmra.mrb[0].mxu0 %v1865
        %v2410 = vpop.f32.mrb[0].mxu0
        %v2411 = vadd.f32 %v1991, %v2410
        %v2412 = vpop.f32.mrb[0].mxu0
        %v2413 = vadd.f32 %v1991, %v2412
        %2414 = vmatprep.mubr.f32.mxu0 %v1868
        %2415 = vmatmul.mubr.f32.gmra.mrb[0].mxu0 %v1867
        %v2416 = vpop.f32.mrb[0].mxu0
        %v2417 = vadd.f32 %v1996, %v2416
        %v2418 = vpop.f32.mrb[0].mxu0
        %v2419 = vadd.f32 %v1996, %v2418
        %2420 = vmatprep.mubr.f32.mxu0 %v1870
        %2421 = vmatmul.mubr.f32.gmra.mrb[0].mxu0 %v1869
        %v2422 = vpop.f32.mrb[0].mxu0
        %v2423 = vadd.f32 %v2001, %v2422
        %v2424 = vpop.f32.mrb[0].mxu0
        %v2425 = vadd.f32 %v2001, %v2424
        %2426 = vmatprep.mubr.f32.mxu0 %v1872
        %2427 = vmatmul.mubr.f32.gmra.mrb[0].mxu0 %v1871
        %v2428 = vpop.f32.mrb[0].mxu0
        %v2429 = vadd.f32 %v2006, %v2428
        %v2430 = vpop.f32.mrb[0].mxu0
        %v2431 = vadd.f32 %v2006, %v2430
        %2432 = vmatprep.mubr.f32.mxu0 %v1874
        %2433 = vmatmul.mubr.f32.gmra.mrb[0].mxu0 %v1873
        %v2434 = vpop.f32.mrb[0].mxu0
        %v2435 = vadd.f32 %v2011, %v2434
        %v2436 = vpop.f32.mrb[0].mxu0
        %v2437 = vadd.f32 %v2011, %v2436
        %2438 = vmatprep.mubr.f32.mxu0 %v1876
        %2439 = vmatmul.mubr.f32.gmra.mrb[0].mxu0 %v1875
        %v2440 = vpop.f32.mrb[0].mxu0
        %v2441 = vadd.f32 %v2016, %v2440
        %v2442 = vpop.f32.mrb[0].mxu0
        %v2443 = vadd.f32 %v2016, %v2442
        %2444 = vmatprep.mubr.f32.mxu0 %v1878
        %2445 = vmatmul.mubr.f32.gmra.mrb[0].mxu0 %v1877
        %v2446 = vpop.f32.mrb[0].mxu0
        %v2447 = vadd.f32 %v2021, %v2446
        %v2448 = vpop.f32.mrb[0].mxu0
        %v2449 = vadd.f32 %v2021, %v2448
        %2450 = vmatprep.mubr.f32.mxu0 %v1880
        %2451 = vmatmul.mubr.f32.gmra.mrb[0].mxu0 %v1879
        %v2452 = vpop.f32.mrb[0].mxu0
        %v2453 = vadd.f32 %v2026, %v2452
        %v2454 = vpop.f32.mrb[0].mxu0
        %v2455 = vadd.f32 %v2026, %v2454
        %2456 = vmatprep.mubr.f32.mxu0 %v1882
        %2457 = vmatmul.mubr.f32.gmra.mrb[0].mxu0 %v1881
        %v2458 = vpop.f32.mrb[0].mxu0
        %v2459 = vadd.f32 %v2031, %v2458
        %v2460 = vpop.f32.mrb[0].mxu0
        %v2461 = vadd.f32 %v2031, %v2460
        %2462 = vdwg.mxu0
        %v2465 = vlaneseq
        %v2466 = vshrl.u32 %v2465, 7
        %v2467 = vsub.s32 0, %v2466
        %v2468 = vrot.slane %v370, %v2467
        %v2469 = vlaneseq
        %v2470 = vshrl.u32 %v2469, 7
        %v2471 = vsub.s32 4, %v2470
        %v2472 = vrot.slane %v370, %v2471
        %v2473 = vlaneseq
        %v2474 = vshrl.u32 %v2473, 7
        %v2475 = vsub.s32 0, %v2474
        %v2476 = vrot.slane %v371, %v2475
        %v2477 = vlaneseq
        %v2478 = vshrl.u32 %v2477, 7
        %v2479 = vsub.s32 4, %v2478
        %v2480 = vrot.slane %v371, %v2479
        %v2485 = vlaneseq
        %v2486 = vshrl.u32 %v2485, 7
        %v2487 = vsub.s32 0, %v2486
        %v2488 = vrot.slane %v2468, %v2487
        %v2489 = vlaneseq
        %v2490 = vshrl.u32 %v2489, 7
        %v2491 = vsub.s32 0, %v2490
        %v2492 = vrot.slane %v2472, %v2491
        %v2493 = vlaneseq
        %v2494 = vshrl.u32 %v2493, 7
        %v2495 = vsub.s32 0, %v2494
        %v2496 = vrot.slane %v2476, %v2495
        %v2497 = vlaneseq
        %v2498 = vshrl.u32 %v2497, 7
        %v2499 = vsub.s32 0, %v2498
        %v2500 = vrot.slane %v2480, %v2499
        %v2501 = vmul.f32 %v2488, %v2100
        %v2502 = vmul.f32 %v2492, %v2102
        %v2503 = vmul.f32 %v2496, %v2315
        %v2504 = vmul.f32 %v2500, %v2317
        %v2505 = vmul.f32 %v2488, %v2106
        %v2506 = vmul.f32 %v2492, %v2108
        %v2507 = vmul.f32 %v2496, %v2321
        %v2508 = vmul.f32 %v2500, %v2323
        %v2509 = vmul.f32 %v2488, %v2112
        %v2510 = vmul.f32 %v2492, %v2114
        %v2511 = vmul.f32 %v2496, %v2327
        %v2512 = vmul.f32 %v2500, %v2329
        %v2513 = vmul.f32 %v2488, %v2118
        %v2514 = vmul.f32 %v2492, %v2120
        %v2515 = vmul.f32 %v2496, %v2333
        %v2516 = vmul.f32 %v2500, %v2335
        %v2517 = vadd.f32 %v2220, %v2501
        %v2518 = vadd.f32 %v2222, %v2502
        %v2519 = vadd.f32 %v2435, %v2503
        %v2520 = vadd.f32 %v2437, %v2504
        %v2521 = vadd.f32 %v2226, %v2505
        %v2522 = vadd.f32 %v2228, %v2506
        %v2523 = vadd.f32 %v2441, %v2507
        %v2524 = vadd.f32 %v2443, %v2508
        %v2525 = vadd.f32 %v2232, %v2509
        %v2526 = vadd.f32 %v2234, %v2510
        %v2527 = vadd.f32 %v2447, %v2511
        %v2528 = vadd.f32 %v2449, %v2512
        %v2529 = vadd.f32 %v2238, %v2513
        %v2530 = vadd.f32 %v2240, %v2514
        %v2531 = vadd.f32 %v2453, %v2515
        %v2532 = vadd.f32 %v2455, %v2516
        %v2533 = vlaneseq
        %v2534 = vshrl.u32 %v2533, 7
        %v2535 = vsub.s32 1, %v2534
        %v2536 = vrot.slane %v370, %v2535
        %v2537 = vlaneseq
        %v2538 = vshrl.u32 %v2537, 7
        %v2539 = vsub.s32 5, %v2538
        %v2540 = vrot.slane %v370, %v2539
        %v2541 = vlaneseq
        %v2542 = vshrl.u32 %v2541, 7
        %v2543 = vsub.s32 1, %v2542
        %v2544 = vrot.slane %v371, %v2543
        %v2545 = vlaneseq
        %v2546 = vshrl.u32 %v2545, 7
        %v2547 = vsub.s32 5, %v2546
        %v2548 = vrot.slane %v371, %v2547
        %v2553 = vlaneseq
        %v2554 = vshrl.u32 %v2553, 7
        %v2555 = vsub.s32 1, %v2554
        %v2556 = vrot.slane %v2536, %v2555
        %v2557 = vlaneseq
        %v2558 = vshrl.u32 %v2557, 7
        %v2559 = vsub.s32 1, %v2558
        %v2560 = vrot.slane %v2540, %v2559
        %v2561 = vlaneseq
        %v2562 = vshrl.u32 %v2561, 7
        %v2563 = vsub.s32 1, %v2562
        %v2564 = vrot.slane %v2544, %v2563
        %v2565 = vlaneseq
        %v2566 = vshrl.u32 %v2565, 7
        %v2567 = vsub.s32 1, %v2566
        %v2568 = vrot.slane %v2548, %v2567
        %v2569 = vmul.f32 %v2556, %v2124
        %v2570 = vmul.f32 %v2560, %v2126
        %v2571 = vmul.f32 %v2564, %v2339
        %v2572 = vmul.f32 %v2568, %v2341
        %v2573 = vmul.f32 %v2556, %v2130
        %v2574 = vmul.f32 %v2560, %v2132
        %v2575 = vmul.f32 %v2564, %v2345
        %v2576 = vmul.f32 %v2568, %v2347
        %v2577 = vmul.f32 %v2556, %v2136
        %v2578 = vmul.f32 %v2560, %v2138
        %v2579 = vmul.f32 %v2564, %v2351
        %v2580 = vmul.f32 %v2568, %v2353
        %v2581 = vmul.f32 %v2556, %v2142
        %v2582 = vmul.f32 %v2560, %v2144
        %v2583 = vmul.f32 %v2564, %v2357
        %v2584 = vmul.f32 %v2568, %v2359
        %v2585 = vadd.f32 %v2517, %v2569
        %v2586 = vadd.f32 %v2518, %v2570
        %v2587 = vadd.f32 %v2519, %v2571
        %v2588 = vadd.f32 %v2520, %v2572
        %v2589 = vadd.f32 %v2521, %v2573
        %v2590 = vadd.f32 %v2522, %v2574
        %v2591 = vadd.f32 %v2523, %v2575
        %v2592 = vadd.f32 %v2524, %v2576
        %v2593 = vadd.f32 %v2525, %v2577
        %v2594 = vadd.f32 %v2526, %v2578
        %v2595 = vadd.f32 %v2527, %v2579
        %v2596 = vadd.f32 %v2528, %v2580
        %v2597 = vadd.f32 %v2529, %v2581
        %v2598 = vadd.f32 %v2530, %v2582
        %v2599 = vadd.f32 %v2531, %v2583
        %v2600 = vadd.f32 %v2532, %v2584
        %v2601 = vlaneseq
        %v2602 = vshrl.u32 %v2601, 7
        %v2603 = vsub.s32 2, %v2602
        %v2604 = vrot.slane %v370, %v2603
        %v2605 = vlaneseq
        %v2606 = vshrl.u32 %v2605, 7
        %v2607 = vsub.s32 6, %v2606
        %v2608 = vrot.slane %v370, %v2607
        %v2609 = vlaneseq
        %v2610 = vshrl.u32 %v2609, 7
        %v2611 = vsub.s32 2, %v2610
        %v2612 = vrot.slane %v371, %v2611
        %v2613 = vlaneseq
        %v2614 = vshrl.u32 %v2613, 7
        %v2615 = vsub.s32 6, %v2614
        %v2616 = vrot.slane %v371, %v2615
        %v2621 = vlaneseq
        %v2622 = vshrl.u32 %v2621, 7
        %v2623 = vsub.s32 2, %v2622
        %v2624 = vrot.slane %v2604, %v2623
        %v2625 = vlaneseq
        %v2626 = vshrl.u32 %v2625, 7
        %v2627 = vsub.s32 2, %v2626
        %v2628 = vrot.slane %v2608, %v2627
        %v2629 = vlaneseq
        %v2630 = vshrl.u32 %v2629, 7
        %v2631 = vsub.s32 2, %v2630
        %v2632 = vrot.slane %v2612, %v2631
        %v2633 = vlaneseq
        %v2634 = vshrl.u32 %v2633, 7
        %v2635 = vsub.s32 2, %v2634
        %v2636 = vrot.slane %v2616, %v2635
        %v2637 = vmul.f32 %v2624, %v2148
        %v2638 = vmul.f32 %v2628, %v2150
        %v2639 = vmul.f32 %v2632, %v2363
        %v2640 = vmul.f32 %v2636, %v2365
        %v2641 = vmul.f32 %v2624, %v2154
        %v2642 = vmul.f32 %v2628, %v2156
        %v2643 = vmul.f32 %v2632, %v2369
        %v2644 = vmul.f32 %v2636, %v2371
        %v2645 = vmul.f32 %v2624, %v2160
        %v2646 = vmul.f32 %v2628, %v2162
        %v2647 = vmul.f32 %v2632, %v2375
        %v2648 = vmul.f32 %v2636, %v2377
        %v2649 = vmul.f32 %v2624, %v2166
        %v2650 = vmul.f32 %v2628, %v2168
        %v2651 = vmul.f32 %v2632, %v2381
        %v2652 = vmul.f32 %v2636, %v2383
        %v2653 = vadd.f32 %v2585, %v2637
        %v2654 = vadd.f32 %v2586, %v2638
        %v2655 = vadd.f32 %v2587, %v2639
        %v2656 = vadd.f32 %v2588, %v2640
        %v2657 = vadd.f32 %v2589, %v2641
        %v2658 = vadd.f32 %v2590, %v2642
        %v2659 = vadd.f32 %v2591, %v2643
        %v2660 = vadd.f32 %v2592, %v2644
        %v2661 = vadd.f32 %v2593, %v2645
        %v2662 = vadd.f32 %v2594, %v2646
        %v2663 = vadd.f32 %v2595, %v2647
        %v2664 = vadd.f32 %v2596, %v2648
        %v2665 = vadd.f32 %v2597, %v2649
        %v2666 = vadd.f32 %v2598, %v2650
        %v2667 = vadd.f32 %v2599, %v2651
        %v2668 = vadd.f32 %v2600, %v2652
        %v2669 = vlaneseq
        %v2670 = vshrl.u32 %v2669, 7
        %v2671 = vsub.s32 3, %v2670
        %v2672 = vrot.slane %v370, %v2671
        %v2673 = vlaneseq
        %v2674 = vshrl.u32 %v2673, 7
        %v2675 = vsub.s32 7, %v2674
        %v2676 = vrot.slane %v370, %v2675
        %v2677 = vlaneseq
        %v2678 = vshrl.u32 %v2677, 7
        %v2679 = vsub.s32 3, %v2678
        %v2680 = vrot.slane %v371, %v2679
        %v2681 = vlaneseq
        %v2682 = vshrl.u32 %v2681, 7
        %v2683 = vsub.s32 7, %v2682
        %v2684 = vrot.slane %v371, %v2683
        %v2689 = vlaneseq
        %v2690 = vshrl.u32 %v2689, 7
        %v2691 = vsub.s32 3, %v2690
        %v2692 = vrot.slane %v2672, %v2691
        %v2693 = vlaneseq
        %v2694 = vshrl.u32 %v2693, 7
        %v2695 = vsub.s32 3, %v2694
        %v2696 = vrot.slane %v2676, %v2695
        %v2697 = vlaneseq
        %v2698 = vshrl.u32 %v2697, 7
        %v2699 = vsub.s32 3, %v2698
        %v2700 = vrot.slane %v2680, %v2699
        %v2701 = vlaneseq
        %v2702 = vshrl.u32 %v2701, 7
        %v2703 = vsub.s32 3, %v2702
        %v2704 = vrot.slane %v2684, %v2703
        %v2705 = vmul.f32 %v2692, %v2172
        %v2706 = vmul.f32 %v2696, %v2174
        %v2707 = vmul.f32 %v2700, %v2387
        %v2708 = vmul.f32 %v2704, %v2389
        %v2709 = vmul.f32 %v2692, %v2178
        %v2710 = vmul.f32 %v2696, %v2180
        %v2711 = vmul.f32 %v2700, %v2393
        %v2712 = vmul.f32 %v2704, %v2395
        %v2713 = vmul.f32 %v2692, %v2184
        %v2714 = vmul.f32 %v2696, %v2186
        %v2715 = vmul.f32 %v2700, %v2399
        %v2716 = vmul.f32 %v2704, %v2401
        %v2717 = vmul.f32 %v2692, %v2190
        %v2718 = vmul.f32 %v2696, %v2192
        %v2719 = vmul.f32 %v2700, %v2405
        %v2720 = vmul.f32 %v2704, %v2407
        %v2721 = vadd.f32 %v2653, %v2705
        %v2722 = vadd.f32 %v2654, %v2706
        %v2723 = vadd.f32 %v2655, %v2707
        %v2724 = vadd.f32 %v2656, %v2708
        %v2725 = vadd.f32 %v2657, %v2709
        %v2726 = vadd.f32 %v2658, %v2710
        %v2727 = vadd.f32 %v2659, %v2711
        %v2728 = vadd.f32 %v2660, %v2712
        %v2729 = vadd.f32 %v2661, %v2713
        %v2730 = vadd.f32 %v2662, %v2714
        %v2731 = vadd.f32 %v2663, %v2715
        %v2732 = vadd.f32 %v2664, %v2716
        %v2733 = vadd.f32 %v2665, %v2717
        %v2734 = vadd.f32 %v2666, %v2718
        %v2735 = vadd.f32 %v2667, %v2719
        %v2736 = vadd.f32 %v2668, %v2720
        %v2737 = vmax.f32 %v2721, 0.0
        %v2738 = vmax.f32 %v2722, 0.0
        %v2739 = vmax.f32 %v2723, 0.0
        %v2740 = vmax.f32 %v2724, 0.0
        %v2741 = vmax.f32 %v2725, 0.0
        %v2742 = vmax.f32 %v2726, 0.0
        %v2743 = vmax.f32 %v2727, 0.0
        %v2744 = vmax.f32 %v2728, 0.0
        %v2745 = vmax.f32 %v2729, 0.0
        %v2746 = vmax.f32 %v2730, 0.0
        %v2747 = vmax.f32 %v2731, 0.0
        %v2748 = vmax.f32 %v2732, 0.0
        %v2749 = vmax.f32 %v2733, 0.0
        %v2750 = vmax.f32 %v2734, 0.0
        %v2751 = vmax.f32 %v2735, 0.0
        %v2752 = vmax.f32 %v2736, 0.0
        %v2753 = vmul.f32 %v2737, %v2196
        %v2754 = vmul.f32 %v2738, %v2198
        %v2755 = vmul.f32 %v2739, %v2411
        %v2756 = vmul.f32 %v2740, %v2413
        %v2757 = vmul.f32 %v2741, %v2202
        %v2758 = vmul.f32 %v2742, %v2204
        %v2759 = vmul.f32 %v2743, %v2417
        %v2760 = vmul.f32 %v2744, %v2419
        %v2761 = vmul.f32 %v2745, %v2208
        %v2762 = vmul.f32 %v2746, %v2210
        %v2763 = vmul.f32 %v2747, %v2423
        %v2764 = vmul.f32 %v2748, %v2425
        %v2765 = vmul.f32 %v2749, %v2214
        %v2766 = vmul.f32 %v2750, %v2216
        %v2767 = vmul.f32 %v2751, %v2429
        %v2768 = vmul.f32 %v2752, %v2431
        %v2769 = vadd.f32 %v2753, %v2757
        %v2770 = vadd.f32 %v2769, %v2761
        %v2771 = vadd.f32 %v2770, %v2765
        %v2772 = vrot.slane %v2771, 4
        %v2773 = vadd.f32 %v2771, %v2772
        %v2774 = vrot.slane %v2773, 2
        %v2775 = vadd.f32 %v2773, %v2774
        %v2776 = vrot.slane %v2775, 1
        %v2777 = vadd.f32 %v2775, %v2776
        %v2778 = vadd.f32 %v2754, %v2758
        %v2779 = vadd.f32 %v2778, %v2762
        %v2780 = vadd.f32 %v2779, %v2766
        %v2781 = vrot.slane %v2780, 4
        %v2782 = vadd.f32 %v2780, %v2781
        %v2783 = vrot.slane %v2782, 2
        %v2784 = vadd.f32 %v2782, %v2783
        %v2785 = vrot.slane %v2784, 1
        %v2786 = vadd.f32 %v2784, %v2785
        %v2787 = vadd.f32 %v2755, %v2759
        %v2788 = vadd.f32 %v2787, %v2763
        %v2789 = vadd.f32 %v2788, %v2767
        %v2790 = vrot.slane %v2789, 4
        %v2791 = vadd.f32 %v2789, %v2790
        %v2792 = vrot.slane %v2791, 2
        %v2793 = vadd.f32 %v2791, %v2792
        %v2794 = vrot.slane %v2793, 1
        %v2795 = vadd.f32 %v2793, %v2794
        %v2796 = vadd.f32 %v2756, %v2760
        %v2797 = vadd.f32 %v2796, %v2764
        %v2798 = vadd.f32 %v2797, %v2768
        %v2799 = vrot.slane %v2798, 4
        %v2800 = vadd.f32 %v2798, %v2799
        %v2801 = vrot.slane %v2800, 2
        %v2802 = vadd.f32 %v2800, %v2801
        %v2803 = vrot.slane %v2802, 1
        %v2804 = vadd.f32 %v2802, %v2803
        %v2805 = vadd.f32 %v2777, %v2244
        %v2806 = vadd.f32 %v2786, %v2246
        %v2807 = vadd.f32 %v2795, %v2459
        %v2808 = vadd.f32 %v2804, %v2461
        %v2813 = vcombine.low %v2805, %v2806
        %v2814 = vcombine.low %v2807, %v2808
        %v2816 = vunpack.c.l.s4 1966171168
        %v2817 = vunpack.c.0.s8 %v2816
        %v2818 = vlaneseq
        %v2819 = vshrl.u32 %v2818, 7
        %v2820 = vsub.s32 %v2817, %v2819
        %v2821 = vrot.slane %v2813, %v2820
        %v2823 = vunpack.c.l.s4 1966171168
        %v2824 = vunpack.c.0.s8 %v2823
        %v2825 = vlaneseq
        %v2826 = vshrl.u32 %v2825, 7
        %v2827 = vsub.s32 %v2824, %v2826
        %v2828 = vrot.slane %v2814, %v2827
        %v2829 = vcombine.low %v2821, %v2828
        %v2831 = vunpack.c.l.s4 1966171168
        %v2832 = vunpack.c.0.s8 %v2831
        %v2833 = vlaneseq
        %v2834 = vshrl.u32 %v2833, 7
        %v2835 = vsub.s32 %v2832, %v2834
        %v2836 = vrot.slane %v2829, %v2835
        %v2838 = vlaneseq
        %vm2839 = vcmp.ge.s32.totalorder %v2838, 0
        %vm2840 = vcmp.lt.s32.totalorder %v2838, 512
        %vm2841 = vmand %vm2839, %vm2840
        %2842 = vst.msk [vmem:[%s353] sm:$0xf] %vm2841, %v2836
        %s2843 = sand.u32 %s208, 1
        %s2844 = scalar_lea.sflag [#allocation4], %s2843
        %s2845 = sand.u32 %s208, 1
        %s2846 = smul.addr %s2845, 4
        %s2847 = scalar_lea.vmem [#allocation3], %s2846
        // Predicated region
        $region76: #{tpu_custom_call.1} parent=70 // pred_check
          %p2848 = pneg %p218
        $region77: #{tpu_custom_call.1} parent=70 // pred_check_branch
          %2850 = sbr.rel (%p2848) target = $region79
        $region78: #{tpu_custom_call.1} parent=70 // pred_region
          %s2851 = smul.u32 4, %s22
          %s2853 = ssub.s32 64, 64
          %2854 = vsyncadd %s2844, %s2853
          %s2855 = smul.addr %s2851, 16
          %s2856 = scalar_lea.hbm %s8, %s2855
          %s2858 = sshll.u32 %s2847, 4
          %s2859 = int_to_ptr.vmem [resolvable:$true] %s2858
          %2861 = dma.vmem_to_hbm [thread:$0]  %s2859, 64, %s2856, %s2844
        $region79: #{tpu_custom_call.1} parent=70 // pred_fallthru
          _
      $region71: #{tpu_custom_call.1} parent=5 // pred_fallthru
        _
      %p2862 = scmp.le.s32.totalorder 2, %s17
      // Predicated region
      $region80: #{tpu_custom_call.1} parent=5 // pred_check
        %p2863 = pneg %p2862
      $region81: #{tpu_custom_call.1} parent=5 // pred_check_branch
        %2865 = sbr.rel (%p2863) target = $region83
      $region82: #{tpu_custom_call.1} parent=5 // pred_region
        %s2866 = ssub.s32 %s17, 2
        // Predicated region
        $region84: #{tpu_custom_call.1} parent=82 // pred_check
          %p2867 = pneg %p224
        $region85: #{tpu_custom_call.1} parent=82 // pred_check_branch
          %2869 = sbr.rel (%p2867) target = $region87
        $region86: #{tpu_custom_call.1} parent=82 // pred_region
          %s2870 = sand.u32 %s209, 1
          %s2871 = scalar_lea.sflag [#allocation4], %s2870
          %s2872 = sand.u32 %s209, 1
          %s2873 = smul.addr %s2872, 4
          %s2874 = scalar_lea.vmem [#allocation3], %s2873
          %2875 = dma.done %s2871, 64
        $region87: #{tpu_custom_call.1} parent=82 // pred_fallthru
          _
      $region83: #{tpu_custom_call.1} parent=5 // pred_fallthru
        _
    $region6: #{tpu_custom_call.1} parent=1 // loop_footer
      %s21 = sadd.s32 1, %s17
    $region7: #{tpu_custom_call.1} parent=1 // loop_footer_branch
      %16 = sbr.rel target = $region3
    $region8: #{tpu_custom_call.1} parent=1 // loop_exit
      _
    %2876 = vsyncpa [#allocation4], 1
    %s2877 = scalar_lea.sflag [#allocation4], 1
    %2878 = vsyncpa %s2877, 1

</llo_original>
